<compile_context>
chip_gen: v7x
topology: tpu7x:2x2x1
jax: 0.10.0
libtpu: 0.0.40
codegen_flags: <defaults>
</compile_context>

<pallas_src>
import functools
import math

import jax
import jax.numpy as jnp
from jax import lax
from jax.experimental import pallas as pl
from jax.experimental.pallas import tpu as pltpu

PAD = 128       # lane width; hidden/output feature dims zero-padded to this
TB_CAP = 1024   # max batch-tile rows (double-buffered streams << VMEM on v5e/v6e/v7x)


def _round_up(x, m):
    return ((x + m - 1) // m) * m


def _mlp_kernel(x_ref, w0_ref, wr_ref, b_ref, o_ref, *, n_layers: int, out_dim: int):
    """One fused MLP batch tile: (tb, in_dim) -> (tb, out_dim).

    x_ref : (tb, in_dim)            natural-width input (no wrapper lane padding)
    w0_ref: (in_dim, PAD)           first-layer weight, output side zero-padded
    wr_ref: (max(L-1,1), PAD, PAD)  remaining layers, zero-padded both sides
    b_ref : (L, 1, PAD)             biases, zero-padded
    o_ref : (tb, out_dim)           natural-width output
    """
    # Layer 0: narrow-K matmul; Mosaic zero-pads the K=in_dim operands in-register.
    h = jnp.dot(x_ref[...], w0_ref[...],
                preferred_element_type=jnp.float32,
                precision=lax.Precision.HIGHEST)
    h = h + b_ref[0]
    # Layers 1..L-1, static unroll: activations stay resident in vregs/VMEM.
    # Zero padding is semantics-preserving: padded weight/bias lanes give 0, tanh(0)=0.
    for l in range(1, n_layers):
        h = jnp.tanh(h)                       # EUP; padded lanes stay exactly 0
        h = jnp.dot(h, wr_ref[l - 1],
                    preferred_element_type=jnp.float32,
                    precision=lax.Precision.HIGHEST)
        h = h + b_ref[l]
    o_ref[...] = h[:, :out_dim].astype(o_ref.dtype)


def init_net_params(config, key):
    """Deterministic xavier_normal_ weights, zero biases (matches InitNet.__init__).

    Weights stored as (in_dim, out_dim) so y = x @ W + b  (== PyTorch x @ W_pt.T + b).
    """
    params = []
    n_layers = len(config) - 1
    for l in range(n_layers):
        in_dim, out_dim = config[l], config[l + 1]
        key, sub = jax.random.split(key)
        std = math.sqrt(2.0 / (in_dim + out_dim))  # xavier normal (gain=1)
        w = std * jax.random.normal(sub, (in_dim, out_dim), dtype=jnp.float32)
        b = jnp.zeros((out_dim,), dtype=jnp.float32)
        params.append((w, b))
    return params


def prepare_init_net_params(params):
    """One-time preprocessing (hoisted out of the forward pass): pad + stack."""
    L = len(params)
    in_dim = params[0][0].shape[0]
    out_dim = params[-1][0].shape[1]
    dims = [in_dim] + [w.shape[1] for w, _ in params]
    assert all(d <= PAD for d in dims[1:]), (
        f"hidden/output dims must be <= {PAD}; got {dims}")

    w0 = jnp.pad(params[0][0].astype(jnp.float32),
                 ((0, 0), (0, PAD - dims[1])))                        # (in_dim, PAD)
    if L > 1:
        w_rest = jnp.stack([
            jnp.pad(w.astype(jnp.float32),
                    ((0, PAD - w.shape[0]), (0, PAD - w.shape[1])))
            for w, _ in params[1:]
        ])                                                            # (L-1, PAD, PAD)
    else:
        w_rest = jnp.zeros((1, PAD, PAD), jnp.float32)                # unused dummy
    b_stack = jnp.stack([
        jnp.pad(b.astype(jnp.float32), (0, PAD - b.shape[0])).reshape(1, PAD)
        for _, b in params
    ])                                                                # (L, 1, PAD)
    return dict(w0=w0, w_rest=w_rest, b_stack=b_stack,
                n_layers=L, in_dim=in_dim, out_dim=out_dim, dims=dims)


def _pick_tb(B):
    if B <= 8:
        return 8
    # >= 2 grid steps so ("parallel",) can shard the batch across v7x's 2 TCs.
    return min(TB_CAP, _round_up(pl.cdiv(B, 2), 8))


def init_net_forward(X, prepared, *, tb=None):
    """Fused forward pass of InitNet: tanh after every layer except the last."""
    B, in_dim = X.shape
    assert in_dim == prepared["in_dim"]
    L = prepared["n_layers"]
    out_dim = prepared["out_dim"]
    w0, w_rest, b_stack = prepared["w0"], prepared["w_rest"], prepared["b_stack"]
    Lr = w_rest.shape[0]

    tb = _pick_tb(B) if tb is None else _round_up(tb, 8)   # (8,128) sublane rule
    Bp = _round_up(B, tb)

    x = X if X.dtype == jnp.float32 else X.astype(jnp.float32)
    if Bp != B:
        x = jnp.pad(x, ((0, Bp - B), (0, 0)))              # batch rows only, no lane padding

    # Advisory cost estimate (padded problem size on the MXU, natural sizes for bytes).
    flops = 2 * Bp * (in_dim * PAD + (L - 1) * PAD * PAD)
    transcendentals = Bp * PAD * (L - 1)
    bytes_accessed = 4 * (Bp * in_dim + w0.size + w_rest.size + b_stack.size + Bp * out_dim)

    out = pl.pallas_call(
        functools.partial(_mlp_kernel, n_layers=L, out_dim=out_dim),
        out_shape=jax.ShapeDtypeStruct((Bp, out_dim), jnp.float32),
        grid=(Bp // tb,),
        in_specs=[
            pl.BlockSpec((tb, in_dim), lambda i: (i, 0)),       # batch-tiled, natural lane width
            pl.BlockSpec((in_dim, PAD), lambda i: (0, 0)),      # first-layer weight (resident)
            pl.BlockSpec((Lr, PAD, PAD), lambda i: (0, 0, 0)),  # remaining weights (resident)
            pl.BlockSpec((L, 1, PAD), lambda i: (0, 0, 0)),     # biases (resident)
        ],
        out_specs=pl.BlockSpec((tb, out_dim), lambda i: (i, 0)),
        compiler_params=pltpu.CompilerParams(
            dimension_semantics=("parallel",),                  # megacore batch sharding on v7x
        ),
        cost_estimate=pl.CostEstimate(
            flops=flops,
            transcendentals=transcendentals,
            bytes_accessed=bytes_accessed,
        ),
    )(x, w0, w_rest, b_stack)

    return out if Bp == B else out[:B]


def init_net_ref(X, params):
    """Pure-JAX reference for verification."""
    h = X
    n = len(params)
    for i, (w, b) in enumerate(params):
        h = h @ w + b
        if i < n - 1:
            h = jnp.tanh(h)
    return h


if __name__ == "__main__":
    key = jax.random.PRNGKey(0)
    config = [4, 32, 32, 8]   # InitNet(config=[in, hidden, hidden, out])
    batch = 16

    key, kx, kp = jax.random.split(key, 3)
    X = jax.random.normal(kx, (batch, config[0]), dtype=jnp.float32)
    params = init_net_params(config, kp)
    prepared = prepare_init_net_params(params)   # one-time pad/stack, reused every call

    out = init_net_forward(X, prepared)
    out = jax.block_until_ready(out)

    ref = init_net_ref(X, params)
    assert out.shape == (batch, config[-1])
    assert jnp.allclose(out, ref, atol=1e-5, rtol=1e-5)

    print("KERNEL_OK")
</pallas_src>

<mosaic_0001>
module attributes {stable_mosaic.version = 11 : i64} {
  func.func @_mlp_kernel(%arg0: i32, %arg1: memref<8x4xf32, #tpu.memory_space<vmem>>, %arg2: memref<4x128xf32, #tpu.memory_space<vmem>>, %arg3: memref<2x128x128xf32, #tpu.memory_space<vmem>>, %arg4: memref<3x1x128xf32, #tpu.memory_space<vmem>>, %arg5: memref<8x8xf32, #tpu.memory_space<vmem>>) attributes {dimension_semantics = [#tpu.dimension_semantics<parallel>], iteration_bounds = array<i64: 2>, scalar_prefetch = 0 : i64, scratch_operands = 0 : i64, tpu.core_type = #tpu.core_type<tc>, window_params = [{transform_indices = @transform_0, window_bounds = array<i64: 8, 4>}, {pipeline_mode = #tpu.pipeline_mode<synchronous>, transform_indices = @transform_1, window_bounds = array<i64: 4, 128>}, {pipeline_mode = #tpu.pipeline_mode<synchronous>, transform_indices = @transform_2, window_bounds = array<i64: 2, 128, 128>}, {pipeline_mode = #tpu.pipeline_mode<synchronous>, transform_indices = @transform_3, window_bounds = array<i64: 3, 1, 128>}, {transform_indices = @transform_4, window_bounds = array<i64: 8, 8>}]} {
    %c0 = arith.constant 0 : index
    %c0_0 = arith.constant 0 : index
    %0 = vector.load %arg1[%c0, %c0_0] : memref<8x4xf32, #tpu.memory_space<vmem>>, vector<8x4xf32>
    %c0_1 = arith.constant 0 : index
    %c0_2 = arith.constant 0 : index
    %1 = vector.load %arg2[%c0_1, %c0_2] : memref<4x128xf32, #tpu.memory_space<vmem>>, vector<4x128xf32>
    %cst = arith.constant dense<0.000000e+00> : vector<8x128xf32>
    %2 = tpu.matmul %0, %1, %cst {dimension_numbers = #tpu.dot_dimension_numbers<[1], [0], [0], [1], [0, 0, 1, 1], [], []>, precision = #tpu.contract_precision<fp32>} : vector<8x4xf32>, vector<4x128xf32>, vector<8x128xf32> -> vector<8x128xf32>
    %c0_3 = arith.constant 0 : index
    %c0_4 = arith.constant 0 : index
    %c0_5 = arith.constant 0 : index
    %3 = vector.load %arg4[%c0_3, %c0_4, %c0_5] : memref<3x1x128xf32, #tpu.memory_space<vmem>>, vector<1x1x128xf32>
    %4 = vector.shape_cast %3 : vector<1x1x128xf32> to vector<1x128xf32>
    %5 = vector.broadcast %4 : vector<1x128xf32> to vector<8x128xf32>
    %6 = arith.addf %2, %5 : vector<8x128xf32>
    %7 = math.tanh %6 : vector<8x128xf32>
    %c0_6 = arith.constant 0 : index
    %c0_7 = arith.constant 0 : index
    %c0_8 = arith.constant 0 : index
    %8 = vector.load %arg3[%c0_6, %c0_7, %c0_8] : memref<2x128x128xf32, #tpu.memory_space<vmem>>, vector<1x128x128xf32>
    %9 = vector.shape_cast %8 : vector<1x128x128xf32> to vector<128x128xf32>
    %cst_9 = arith.constant dense<0.000000e+00> : vector<8x128xf32>
    %10 = tpu.matmul %7, %9, %cst_9 {dimension_numbers = #tpu.dot_dimension_numbers<[1], [0], [0], [1], [0, 0, 1, 1], [], []>, precision = #tpu.contract_precision<fp32>} : vector<8x128xf32>, vector<128x128xf32>, vector<8x128xf32> -> vector<8x128xf32>
    %c1 = arith.constant 1 : index
    %c0_10 = arith.constant 0 : index
    %c0_11 = arith.constant 0 : index
    %11 = vector.load %arg4[%c1, %c0_10, %c0_11] : memref<3x1x128xf32, #tpu.memory_space<vmem>>, vector<1x1x128xf32>
    %12 = vector.shape_cast %11 : vector<1x1x128xf32> to vector<1x128xf32>
    %13 = vector.broadcast %12 : vector<1x128xf32> to vector<8x128xf32>
    %14 = arith.addf %10, %13 : vector<8x128xf32>
    %15 = math.tanh %14 : vector<8x128xf32>
    %c1_12 = arith.constant 1 : index
    %c0_13 = arith.constant 0 : index
    %c0_14 = arith.constant 0 : index
    %16 = vector.load %arg3[%c1_12, %c0_13, %c0_14] : memref<2x128x128xf32, #tpu.memory_space<vmem>>, vector<1x128x128xf32>
    %17 = vector.shape_cast %16 : vector<1x128x128xf32> to vector<128x128xf32>
    %cst_15 = arith.constant dense<0.000000e+00> : vector<8x128xf32>
    %18 = tpu.matmul %15, %17, %cst_15 {dimension_numbers = #tpu.dot_dimension_numbers<[1], [0], [0], [1], [0, 0, 1, 1], [], []>, precision = #tpu.contract_precision<fp32>} : vector<8x128xf32>, vector<128x128xf32>, vector<8x128xf32> -> vector<8x128xf32>
    %c2 = arith.constant 2 : index
    %c0_16 = arith.constant 0 : index
    %c0_17 = arith.constant 0 : index
    %19 = vector.load %arg4[%c2, %c0_16, %c0_17] : memref<3x1x128xf32, #tpu.memory_space<vmem>>, vector<1x1x128xf32>
    %20 = vector.shape_cast %19 : vector<1x1x128xf32> to vector<1x128xf32>
    %21 = vector.broadcast %20 : vector<1x128xf32> to vector<8x128xf32>
    %22 = arith.addf %18, %21 : vector<8x128xf32>
    %23 = vector.extract_strided_slice %22 {offsets = [0, 0], sizes = [8, 8], strides = [1, 1]} : vector<8x128xf32> to vector<8x8xf32>
    %c0_18 = arith.constant 0 : index
    %c0_19 = arith.constant 0 : index
    %24 = vector.load %arg5[%c0_18, %c0_19] : memref<8x8xf32, #tpu.memory_space<vmem>>, vector<8x8xf32>
    tpu.vector_store %arg5[%c0_18, %c0_19], %23 {strides = array<i32>} : memref<8x8xf32, #tpu.memory_space<vmem>>, vector<8x8xf32>,
    return
  }
  func.func @transform_0(%arg0: i32) -> (i32, i32) {
    %c0_i32 = arith.constant 0 : i32
    %c0_i32_0 = arith.constant 0 : i32
    return %arg0, %c0_i32 : i32, i32
  }
  func.func @transform_1(%arg0: i32) -> (i32, i32) {
    %c0_i32 = arith.constant 0 : i32
    %c0_i32_0 = arith.constant 0 : i32
    %c0_i32_1 = arith.constant 0 : i32
    return %c0_i32, %c0_i32_0 : i32, i32
  }
  func.func @transform_2(%arg0: i32) -> (i32, i32, i32) {
    %c0_i32 = arith.constant 0 : i32
    %c0_i32_0 = arith.constant 0 : i32
    %c0_i32_1 = arith.constant 0 : i32
    %c0_i32_2 = arith.constant 0 : i32
    return %c0_i32, %c0_i32_0, %c0_i32_1 : i32, i32, i32
  }
  func.func @transform_3(%arg0: i32) -> (i32, i32, i32) {
    %c0_i32 = arith.constant 0 : i32
    %c0_i32_0 = arith.constant 0 : i32
    %c0_i32_1 = arith.constant 0 : i32
    %c0_i32_2 = arith.constant 0 : i32
    return %c0_i32, %c0_i32_0, %c0_i32_1 : i32, i32, i32
  }
  func.func @transform_4(%arg0: i32) -> (i32, i32) {
    %c0_i32 = arith.constant 0 : i32
    %c0_i32_0 = arith.constant 0 : i32
    return %arg0, %c0_i32 : i32, i32
  }
}

</mosaic_0001>

<llo_original>
// kernel: tpu_custom_call.1
$region0: #{tpu_custom_call.1}
  #allocation0 [shape = 'u32[]', space=smem, size = 0x4, offset = 0x4, fixed_abs, tag = 'smem constant byte address 0x4 - core index']
  #allocation1 [shape = 'u32[144,128]{1,0:T(1,128)}', space=vmem, size = 0x12000, scoped, tag = 'internal scratch']
  %s0 = inlined_call_operand.vmem [shape: f32[16,4], index: 0, kind: input, shape index: {}]
  %s1 = inlined_call_operand.vmem [shape: f32[4,128], index: 1, kind: input, shape index: {}]
  %s2 = inlined_call_operand.hbm [shape: f32[2,128,128], index: 2, kind: input, shape index: {}]
  %s3 = inlined_call_operand.vmem [shape: f32[3,1,128], index: 3, kind: input, shape index: {}]
  %s4 = inlined_call_operand.vmem [shape: f32[16,8], index: 4, kind: output, shape index: {}]
  %s5 = sld [smem:[#allocation0]]
  $region53: #{tpu_custom_call.1} parent=0
    _
  %s7 = ssub.s32 1, %s5
  %s8 = scalar_select 0, %s7, %s5
  $region1: #{tpu_custom_call.1} parent=0
    #allocation2 [shape = 'u8[131072]{0}', space=vmem, size = 0x20000, scoped, tag = 'input window, operand 2, single buffered']
    #allocation3 [shape = 's32[2]{0}', space=sflag, size = 0x8, scoped, tag = 'scoped memory for tpu_custom_call.1']
    %9 = vsyncpa [#allocation3], 0
    loop: start=0, step=1, limit=4
    $region2: #{tpu_custom_call.1} parent=1 // loop_pre_header
      _
    $region3: #{tpu_custom_call.1} parent=1 // loop_header
      %s11 = sphi 0, %s15
      %p12 = scmp.ge.s32.totalorder %s11, 4
      %s21 = sphi 0, %s23
      %s24 = sphi 0, %s21
      %s25 = sphi 0, %s24
      %s41 = sphi 0, %s25
      %s45 = sphi 0, %s45
      %s47 = sphi 0, %s45
      %s48 = sphi 0, %s47
      %s62 = sphi 0, %s48
      %s66 = sphi 0, %s66
      %s68 = sphi 0, %s66
      %s69 = sphi 0, %s68
      %s83 = sphi 0, %s69
      %s87 = sphi 0, %s87
      %s89 = sphi 0, %s87
      %s90 = sphi 0, %s89
      %s104 = sphi 0, %s90
      %s110 = sphi 0, %s112
      %s113 = sphi 0, %s110
      %s114 = sphi 0, %s113
      %s130 = sphi 0, %s114
    $region4: #{tpu_custom_call.1} parent=1 // loop_header_branch
      %14 = sbr.rel (%p12) target = $region8
    $region5: #{tpu_custom_call.1} parent=1 // loop_body
      %s16 = ssub.s32 %s11, 1
      %s17 = ssub.s32 %s11, 2
      %s18 = sadd.s32 %s11, 1
      %s19 = ssub.s32 %s11, %s18
      %p20 = scmp.eq.s32.totalorder %s19, 0
      %s22 = sadd.s32 %s21, 1
      %s23 = scalar_select %p20, %s21, %s22
      %p26 = pneg %p20
      %p27 = scmp.eq.s32.totalorder %s11, 1
      %p28 = por %p26, %p27
      %p29 = scmp.ne.s32.totalorder %s21, %s24
      %p30 = scmp.eq.s32.totalorder %s11, 0
      %p31 = por %p29, %p30
      %p32 = scmp.ne.s32.totalorder %s21, %s24
      %p33 = scmp.eq.s32.totalorder %s16, 1
      %p34 = por %p32, %p33
      %p35 = scmp.ne.s32.totalorder %s24, %s25
      %p36 = scmp.eq.s32.totalorder %s16, 0
      %p37 = por %p35, %p36
      %p38 = scmp.ne.s32.totalorder %s24, %s25
      %p39 = scmp.eq.s32.totalorder %s17, 1
      %p40 = por %p38, %p39
      %p42 = scmp.ne.s32.totalorder %s25, %s41
      %p43 = scmp.eq.s32.totalorder %s17, 0
      %p44 = por %p42, %p43
      %s46 = sadd.s32 %s45, 1
      %p49 = scmp.eq.s32.totalorder %s11, 1
      %p50 = scmp.ne.s32.totalorder %s45, %s47
      %p51 = scmp.eq.s32.totalorder %s11, 0
      %p52 = por %p50, %p51
      %p53 = scmp.ne.s32.totalorder %s45, %s47
      %p54 = scmp.eq.s32.totalorder %s16, 1
      %p55 = por %p53, %p54
      %p56 = scmp.ne.s32.totalorder %s47, %s48
      %p57 = scmp.eq.s32.totalorder %s16, 0
      %p58 = por %p56, %p57
      %p59 = scmp.ne.s32.totalorder %s47, %s48
      %p60 = scmp.eq.s32.totalorder %s17, 1
      %p61 = por %p59, %p60
      %p63 = scmp.ne.s32.totalorder %s48, %s62
      %p64 = scmp.eq.s32.totalorder %s17, 0
      %p65 = por %p63, %p64
      %s67 = sadd.s32 %s66, 1
      %p70 = scmp.eq.s32.totalorder %s11, 1
      %p71 = scmp.ne.s32.totalorder %s66, %s68
      %p72 = scmp.eq.s32.totalorder %s11, 0
      %p73 = por %p71, %p72
      %p74 = scmp.ne.s32.totalorder %s66, %s68
      %p75 = scmp.eq.s32.totalorder %s16, 1
      %p76 = por %p74, %p75
      %p77 = scmp.ne.s32.totalorder %s68, %s69
      %p78 = scmp.eq.s32.totalorder %s16, 0
      %p79 = por %p77, %p78
      %p80 = scmp.ne.s32.totalorder %s68, %s69
      %p81 = scmp.eq.s32.totalorder %s17, 1
      %p82 = por %p80, %p81
      %p84 = scmp.ne.s32.totalorder %s69, %s83
      %p85 = scmp.eq.s32.totalorder %s17, 0
      %p86 = por %p84, %p85
      %s88 = sadd.s32 %s87, 1
      %p91 = scmp.eq.s32.totalorder %s11, 1
      %p92 = scmp.ne.s32.totalorder %s87, %s89
      %p93 = scmp.eq.s32.totalorder %s11, 0
      %p94 = por %p92, %p93
      %p95 = scmp.ne.s32.totalorder %s87, %s89
      %p96 = scmp.eq.s32.totalorder %s16, 1
      %p97 = por %p95, %p96
      %p98 = scmp.ne.s32.totalorder %s89, %s90
      %p99 = scmp.eq.s32.totalorder %s16, 0
      %p100 = por %p98, %p99
      %p101 = scmp.ne.s32.totalorder %s89, %s90
      %p102 = scmp.eq.s32.totalorder %s17, 1
      %p103 = por %p101, %p102
      %p105 = scmp.ne.s32.totalorder %s90, %s104
      %p106 = scmp.eq.s32.totalorder %s17, 0
      %p107 = por %p105, %p106
      %s108 = ssub.s32 %s11, %s18
      %p109 = scmp.eq.s32.totalorder %s108, 0
      %s111 = sadd.s32 %s110, 1
      %s112 = scalar_select %p109, %s110, %s111
      %p115 = pneg %p109
      %p116 = scmp.eq.s32.totalorder %s11, 1
      %p117 = por %p115, %p116
      %p118 = scmp.ne.s32.totalorder %s110, %s113
      %p119 = scmp.eq.s32.totalorder %s11, 0
      %p120 = por %p118, %p119
      %p121 = scmp.ne.s32.totalorder %s110, %s113
      %p122 = scmp.eq.s32.totalorder %s16, 1
      %p123 = por %p121, %p122
      %p124 = scmp.ne.s32.totalorder %s113, %s114
      %p125 = scmp.eq.s32.totalorder %s16, 0
      %p126 = por %p124, %p125
      %p127 = scmp.ne.s32.totalorder %s113, %s114
      %p128 = scmp.eq.s32.totalorder %s17, 1
      %p129 = por %p127, %p128
      %p131 = scmp.ne.s32.totalorder %s114, %s130
      %p132 = scmp.eq.s32.totalorder %s17, 0
      %p133 = por %p131, %p132
      %p134 = scmp.le.s32.totalorder 1, %s11
      %p135 = scmp.lt.s32.totalorder %s11, 3
      %p136 = pnand %p134, %p135
      %p137 = pneg %p136
      // Predicated region
      $region9: #{tpu_custom_call.1} parent=5 // pred_check
        _
      $region10: #{tpu_custom_call.1} parent=5 // pred_check_branch
        %139 = sbr.rel (%p136) target = $region12
      $region11: #{tpu_custom_call.1} parent=5 // pred_region
        %s140 = ssub.s32 %s11, 1
        // Predicated region
        $region13: #{tpu_custom_call.1} parent=11 // pred_check
          %p141 = pneg %p58
        $region14: #{tpu_custom_call.1} parent=11 // pred_check_branch
          %143 = sbr.rel (%p141) target = $region16
        $region15: #{tpu_custom_call.1} parent=11 // pred_region
          _
        $region16: #{tpu_custom_call.1} parent=11 // pred_fallthru
          _
        // Predicated region
        $region17: #{tpu_custom_call.1} parent=11 // pred_check
          %p144 = pneg %p79
        $region18: #{tpu_custom_call.1} parent=11 // pred_check_branch
          %146 = sbr.rel (%p144) target = $region20
        $region19: #{tpu_custom_call.1} parent=11 // pred_region
          %s148 = ssub.s32 4096, 4096
          %149 = vsyncadd [#allocation3], %s148
          %s150 = sshll.u32 [#allocation2], 4
          %s151 = int_to_ptr.vmem [resolvable:$true] %s150
          %156 = dma.hbm_to_vmem [thread:$0]  %s2, 4096, %s151, [#allocation3], 128, 128, 8
        $region20: #{tpu_custom_call.1} parent=11 // pred_fallthru
          _
        // Predicated region
        $region21: #{tpu_custom_call.1} parent=11 // pred_check
          %p157 = pneg %p100
        $region22: #{tpu_custom_call.1} parent=11 // pred_check_branch
          %159 = sbr.rel (%p157) target = $region24
        $region23: #{tpu_custom_call.1} parent=11 // pred_region
          _
        $region24: #{tpu_custom_call.1} parent=11 // pred_fallthru
          _
      $region12: #{tpu_custom_call.1} parent=5 // pred_fallthru
        _
      %p160 = scmp.lt.s32.totalorder %s11, 2
      // Predicated region
      $region25: #{tpu_custom_call.1} parent=5 // pred_check
        %p161 = pneg %p160
      $region26: #{tpu_custom_call.1} parent=5 // pred_check_branch
        %163 = sbr.rel (%p161) target = $region28
      $region27: #{tpu_custom_call.1} parent=5 // pred_region
        // Predicated region
        $region29: #{tpu_custom_call.1} parent=27 // pred_check
          %p164 = pneg %p31
        $region30: #{tpu_custom_call.1} parent=27 // pred_check_branch
          %166 = sbr.rel (%p164) target = $region32
        $region31: #{tpu_custom_call.1} parent=27 // pred_region
          %p167 = scmp.lt.s32.totalorder %s11, 1
          %s168 = scalar_select %p167, %s11, 1
          %s169 = smul.addr %s168, 8
          %s170 = scalar_lea.vmem %s0, %s169
        $region32: #{tpu_custom_call.1} parent=27 // pred_fallthru
          _
      $region28: #{tpu_custom_call.1} parent=5 // pred_fallthru
        _
      %p171 = scmp.le.s32.totalorder 1, %s11
      %p172 = scmp.lt.s32.totalorder %s11, 3
      %p173 = pnand %p171, %p172
      %p174 = pneg %p173
      // Predicated region
      $region33: #{tpu_custom_call.1} parent=5 // pred_check
        _
      $region34: #{tpu_custom_call.1} parent=5 // pred_check_branch
        %176 = sbr.rel (%p173) target = $region36
      $region35: #{tpu_custom_call.1} parent=5 // pred_region
        %s177 = ssub.s32 %s11, 1
        // Predicated region
        $region37: #{tpu_custom_call.1} parent=35 // pred_check
          %p178 = pneg %p79
        $region38: #{tpu_custom_call.1} parent=35 // pred_check_branch
          %180 = sbr.rel (%p178) target = $region40
        $region39: #{tpu_custom_call.1} parent=35 // pred_region
          %181 = dma.done [#allocation3], 4096
        $region40: #{tpu_custom_call.1} parent=35 // pred_fallthru
          _
        %p182 = scmp.lt.s32.totalorder %s16, 1
        %s183 = scalar_select %p182, %s16, 1
        %s184 = smul.addr %s183, 8
        %s185 = scalar_lea.vmem %s0, %s184
        %p186 = pneg %p37
        %p187 = pneg %p34
        %p188 = pneg %p58
        %p189 = pneg %p55
        %p190 = pneg %p79
        %p191 = pneg %p76
        %p192 = pneg %p100
        %p193 = pneg %p97
        %p194 = pneg %p126
        %p195 = pneg %p123
        %p196 = scmp.lt.s32.totalorder %s16, 1
        %s197 = scalar_select %p196, %s16, 1
        %s198 = smul.addr %s197, 8
        %s199 = scalar_lea.vmem %s4, %s198
        %p200 = scmp.lt.s32.totalorder %s16, 1
        %s201 = scalar_select %p200, %s16, 1
        %s202 = smul.addr %s201, 8
        %s203 = scalar_lea.vmem %s0, %s202
        %p204 = scmp.lt.s32.totalorder %s16, 1
        %s205 = scalar_select %p204, %s16, 1
        %s206 = smul.addr %s205, 8
        %s207 = scalar_lea.vmem %s4, %s206
        %v208 = vld [vmem:[%s203] sm:$0xff]
        %v209 = vld [vmem:[%s1] sm:$0xf]
        %v210 = vld [vmem:[%s3] sm:$0x1]
        %v212 = vlaneseq
        %v213 = vshrl.u32 %v212, 7
        %v214 = vsub.s32 0, %v213
        %v215 = vrot.slane %v210, %v214
        %vm217 = vcmask 31744
        %v219 = vsel %vm217, %v208, 0
        %vm221 = vcmask 1043456
        %v223 = vsel %vm221, %v209, 0
        %225 = vmatprep.subr.mxu0 0.0
        %v226 = vand.u32 %v223, 4294901760
        %227 = vmatpush1.msra.mxu0 %v226
        %228 = vmatprep.subr.mxu0 0.0
        %229 = vmatpush1.msra.mxu0 0.0
        %230 = vmatprep.subr.mxu0 0.0
        %231 = vmatpush1.msra.mxu0 0.0
        %232 = vmatprep.subr.mxu0 0.0
        %233 = vmatpush1.msra.mxu0 0.0
        %234 = vmatprep.subr.mxu0 0.0
        %235 = vmatpush1.msra.mxu0 0.0
        %236 = vmatprep.subr.mxu0 0.0
        %237 = vmatpush1.msra.mxu0 0.0
        %238 = vmatprep.subr.mxu0 0.0
        %239 = vmatpush1.msra.mxu0 0.0
        %240 = vmatprep.subr.mxu0 0.0
        %241 = vmatpush1.msra.mxu0 0.0
        %242 = vmatprep.subr.mxu0 0.0
        %243 = vmatpush1.msra.mxu0 0.0
        %244 = vmatprep.subr.mxu0 0.0
        %245 = vmatpush1.msra.mxu0 0.0
        %246 = vmatprep.subr.mxu0 0.0
        %247 = vmatpush1.msra.mxu0 0.0
        %248 = vmatprep.subr.mxu0 0.0
        %249 = vmatpush1.msra.mxu0 0.0
        %250 = vmatprep.subr.mxu0 0.0
        %251 = vmatpush1.msra.mxu0 0.0
        %252 = vmatprep.subr.mxu0 0.0
        %253 = vmatpush1.msra.mxu0 0.0
        %254 = vmatprep.subr.mxu0 0.0
        %255 = vmatpush1.msra.mxu0 0.0
        %256 = vmatprep.subr.mxu0 0.0
        %257 = vmatpush1.msra.mxu0 0.0
        %258 = vmatprep.subr.mxu0 0.0
        %259 = vmatpush1.msra.mxu0 0.0
        %260 = vmatprep.subr.mxu0 0.0
        %261 = vmatpush1.msra.mxu0 0.0
        %262 = vmatprep.subr.mxu0 0.0
        %263 = vmatpush1.msra.mxu0 0.0
        %264 = vmatprep.subr.mxu0 0.0
        %265 = vmatpush1.msra.mxu0 0.0
        %266 = vmatprep.subr.mxu0 0.0
        %267 = vmatpush1.msra.mxu0 0.0
        %268 = vmatprep.subr.mxu0 0.0
        %269 = vmatpush1.msra.mxu0 0.0
        %270 = vmatprep.subr.mxu0 0.0
        %271 = vmatpush1.msra.mxu0 0.0
        %272 = vmatprep.subr.mxu0 0.0
        %273 = vmatpush1.msra.mxu0 0.0
        %274 = vmatprep.subr.mxu0 0.0
        %275 = vmatpush1.msra.mxu0 0.0
        %276 = vmatprep.subr.mxu0 0.0
        %277 = vmatpush1.msra.mxu0 0.0
        %278 = vmatprep.subr.mxu0 0.0
        %279 = vmatpush1.msra.mxu0 0.0
        %280 = vmatprep.subr.mxu0 0.0
        %281 = vmatpush1.msra.mxu0 0.0
        %282 = vmatprep.subr.mxu0 0.0
        %283 = vmatpush1.msra.mxu0 0.0
        %284 = vmatprep.subr.mxu0 0.0
        %285 = vmatpush1.msra.mxu0 0.0
        %286 = vmatprep.subr.mxu0 0.0
        %287 = vmatpush1.msra.mxu0 0.0
        %288 = vmatprep.subr.mxu0 0.0
        %289 = vmatpush1.msra.mxu0 0.0
        %290 = vmatprep.mubr.f32.mxu0 0.0
        %v291 = vand.u32 %v219, 4294901760
        %v292 = vsub.f32 %v219, %v291
        %v293 = vand.u32 %v292, 4294901760
        %v294 = vsub.f32 %v292, %v293
        %v295 = vand.u32 %v294, 4294901760
        %296 = vmatmul.mubr.f32.gmra.mrb[0].mxu0 %v295
        %v297 = vpop.f32.mrb[0].mxu0
        %v298 = vadd.f32 %v215, %v297
        %v299 = vpop.f32.mrb[0].mxu0
        %300 = vdwg.mxu0
        %301 = vmatprep.subr.mxu0 0.0
        %v302 = vand.u32 %v223, 4294901760
        %v303 = vsub.f32 %v223, %v302
        %v304 = vand.u32 %v303, 4294901760
        %v305 = vsub.f32 %v303, %v304
        %v306 = vand.u32 %v305, 4294901760
        %307 = vmatpush1.msra.mxu0 %v306
        %308 = vmatprep.subr.mxu0 0.0
        %309 = vmatpush1.msra.mxu0 0.0
        %310 = vmatprep.subr.mxu0 0.0
        %311 = vmatpush1.msra.mxu0 0.0
        %312 = vmatprep.subr.mxu0 0.0
        %313 = vmatpush1.msra.mxu0 0.0
        %314 = vmatprep.subr.mxu0 0.0
        %315 = vmatpush1.msra.mxu0 0.0
        %316 = vmatprep.subr.mxu0 0.0
        %317 = vmatpush1.msra.mxu0 0.0
        %318 = vmatprep.subr.mxu0 0.0
        %319 = vmatpush1.msra.mxu0 0.0
        %320 = vmatprep.subr.mxu0 0.0
        %321 = vmatpush1.msra.mxu0 0.0
        %322 = vmatprep.subr.mxu0 0.0
        %323 = vmatpush1.msra.mxu0 0.0
        %324 = vmatprep.subr.mxu0 0.0
        %325 = vmatpush1.msra.mxu0 0.0
        %326 = vmatprep.subr.mxu0 0.0
        %327 = vmatpush1.msra.mxu0 0.0
        %328 = vmatprep.subr.mxu0 0.0
        %329 = vmatpush1.msra.mxu0 0.0
        %330 = vmatprep.subr.mxu0 0.0
        %331 = vmatpush1.msra.mxu0 0.0
        %332 = vmatprep.subr.mxu0 0.0
        %333 = vmatpush1.msra.mxu0 0.0
        %334 = vmatprep.subr.mxu0 0.0
        %335 = vmatpush1.msra.mxu0 0.0
        %336 = vmatprep.subr.mxu0 0.0
        %337 = vmatpush1.msra.mxu0 0.0
        %338 = vmatprep.subr.mxu0 0.0
        %339 = vmatpush1.msra.mxu0 0.0
        %340 = vmatprep.subr.mxu0 0.0
        %341 = vmatpush1.msra.mxu0 0.0
        %342 = vmatprep.subr.mxu0 0.0
        %343 = vmatpush1.msra.mxu0 0.0
        %344 = vmatprep.subr.mxu0 0.0
        %345 = vmatpush1.msra.mxu0 0.0
        %346 = vmatprep.subr.mxu0 0.0
        %347 = vmatpush1.msra.mxu0 0.0
        %348 = vmatprep.subr.mxu0 0.0
        %349 = vmatpush1.msra.mxu0 0.0
        %350 = vmatprep.subr.mxu0 0.0
        %351 = vmatpush1.msra.mxu0 0.0
        %352 = vmatprep.subr.mxu0 0.0
        %353 = vmatpush1.msra.mxu0 0.0
        %354 = vmatprep.subr.mxu0 0.0
        %355 = vmatpush1.msra.mxu0 0.0
        %356 = vmatprep.subr.mxu0 0.0
        %357 = vmatpush1.msra.mxu0 0.0
        %358 = vmatprep.subr.mxu0 0.0
        %359 = vmatpush1.msra.mxu0 0.0
        %360 = vmatprep.subr.mxu0 0.0
        %361 = vmatpush1.msra.mxu0 0.0
        %362 = vmatprep.subr.mxu0 0.0
        %363 = vmatpush1.msra.mxu0 0.0
        %364 = vmatprep.subr.mxu0 0.0
        %365 = vmatpush1.msra.mxu0 0.0
        %366 = vmatprep.subr.mxu0 0.0
        %367 = vmatpush1.msra.mxu0 0.0
        %368 = vmatprep.subr.mxu0 0.0
        %369 = vmatpush1.msra.mxu0 0.0
        %370 = vmatprep.mubr.f32.mxu0 0.0
        %v371 = vand.u32 %v219, 4294901760
        %372 = vmatmul.mubr.f32.gmra.mrb[0].mxu0 %v371
        %v373 = vpop.f32.mrb[0].mxu0
        %v374 = vadd.f32 %v298, %v373
        %v375 = vpop.f32.mrb[0].mxu0
        %376 = vdwg.mxu0
        %377 = vmatprep.subr.mxu0 0.0
        %v378 = vand.u32 %v223, 4294901760
        %v379 = vsub.f32 %v223, %v378
        %380 = vmatpush1.msra.mxu0 %v379
        %381 = vmatprep.subr.mxu0 0.0
        %382 = vmatpush1.msra.mxu0 0.0
        %383 = vmatprep.subr.mxu0 0.0
        %384 = vmatpush1.msra.mxu0 0.0
        %385 = vmatprep.subr.mxu0 0.0
        %386 = vmatpush1.msra.mxu0 0.0
        %387 = vmatprep.subr.mxu0 0.0
        %388 = vmatpush1.msra.mxu0 0.0
        %389 = vmatprep.subr.mxu0 0.0
        %390 = vmatpush1.msra.mxu0 0.0
        %391 = vmatprep.subr.mxu0 0.0
        %392 = vmatpush1.msra.mxu0 0.0
        %393 = vmatprep.subr.mxu0 0.0
        %394 = vmatpush1.msra.mxu0 0.0
        %395 = vmatprep.subr.mxu0 0.0
        %396 = vmatpush1.msra.mxu0 0.0
        %397 = vmatprep.subr.mxu0 0.0
        %398 = vmatpush1.msra.mxu0 0.0
        %399 = vmatprep.subr.mxu0 0.0
        %400 = vmatpush1.msra.mxu0 0.0
        %401 = vmatprep.subr.mxu0 0.0
        %402 = vmatpush1.msra.mxu0 0.0
        %403 = vmatprep.subr.mxu0 0.0
        %404 = vmatpush1.msra.mxu0 0.0
        %405 = vmatprep.subr.mxu0 0.0
        %406 = vmatpush1.msra.mxu0 0.0
        %407 = vmatprep.subr.mxu0 0.0
        %408 = vmatpush1.msra.mxu0 0.0
        %409 = vmatprep.subr.mxu0 0.0
        %410 = vmatpush1.msra.mxu0 0.0
        %411 = vmatprep.subr.mxu0 0.0
        %412 = vmatpush1.msra.mxu0 0.0
        %413 = vmatprep.subr.mxu0 0.0
        %414 = vmatpush1.msra.mxu0 0.0
        %415 = vmatprep.subr.mxu0 0.0
        %416 = vmatpush1.msra.mxu0 0.0
        %417 = vmatprep.subr.mxu0 0.0
        %418 = vmatpush1.msra.mxu0 0.0
        %419 = vmatprep.subr.mxu0 0.0
        %420 = vmatpush1.msra.mxu0 0.0
        %421 = vmatprep.subr.mxu0 0.0
        %422 = vmatpush1.msra.mxu0 0.0
        %423 = vmatprep.subr.mxu0 0.0
        %424 = vmatpush1.msra.mxu0 0.0
        %425 = vmatprep.subr.mxu0 0.0
        %426 = vmatpush1.msra.mxu0 0.0
        %427 = vmatprep.subr.mxu0 0.0
        %428 = vmatpush1.msra.mxu0 0.0
        %429 = vmatprep.subr.mxu0 0.0
        %430 = vmatpush1.msra.mxu0 0.0
        %431 = vmatprep.subr.mxu0 0.0
        %432 = vmatpush1.msra.mxu0 0.0
        %433 = vmatprep.subr.mxu0 0.0
        %434 = vmatpush1.msra.mxu0 0.0
        %435 = vmatprep.subr.mxu0 0.0
        %436 = vmatpush1.msra.mxu0 0.0
        %437 = vmatprep.subr.mxu0 0.0
        %438 = vmatpush1.msra.mxu0 0.0
        %439 = vmatprep.subr.mxu0 0.0
        %440 = vmatpush1.msra.mxu0 0.0
        %441 = vmatprep.subr.mxu0 0.0
        %442 = vmatpush1.msra.mxu0 0.0
        %443 = vmatprep.mubr.f32.mxu0 0.0
        %v444 = vand.u32 %v219, 4294901760
        %v445 = vsub.f32 %v219, %v444
        %446 = vmatmul.mubr.f32.gmra.mrb[0].mxu0 %v445
        %v447 = vpop.f32.mrb[0].mxu0
        %v448 = vadd.f32 %v374, %v447
        %v449 = vpop.f32.mrb[0].mxu0
        %450 = vdwg.mxu0
        %451 = vmatprep.subr.mxu0 0.0
        %v452 = vand.u32 %v223, 4294901760
        %453 = vmatpush1.msra.mxu0 %v452
        %454 = vmatprep.subr.mxu0 0.0
        %455 = vmatpush1.msra.mxu0 0.0
        %456 = vmatprep.subr.mxu0 0.0
        %457 = vmatpush1.msra.mxu0 0.0
        %458 = vmatprep.subr.mxu0 0.0
        %459 = vmatpush1.msra.mxu0 0.0
        %460 = vmatprep.subr.mxu0 0.0
        %461 = vmatpush1.msra.mxu0 0.0
        %462 = vmatprep.subr.mxu0 0.0
        %463 = vmatpush1.msra.mxu0 0.0
        %464 = vmatprep.subr.mxu0 0.0
        %465 = vmatpush1.msra.mxu0 0.0
        %466 = vmatprep.subr.mxu0 0.0
        %467 = vmatpush1.msra.mxu0 0.0
        %468 = vmatprep.subr.mxu0 0.0
        %469 = vmatpush1.msra.mxu0 0.0
        %470 = vmatprep.subr.mxu0 0.0
        %471 = vmatpush1.msra.mxu0 0.0
        %472 = vmatprep.subr.mxu0 0.0
        %473 = vmatpush1.msra.mxu0 0.0
        %474 = vmatprep.subr.mxu0 0.0
        %475 = vmatpush1.msra.mxu0 0.0
        %476 = vmatprep.subr.mxu0 0.0
        %477 = vmatpush1.msra.mxu0 0.0
        %478 = vmatprep.subr.mxu0 0.0
        %479 = vmatpush1.msra.mxu0 0.0
        %480 = vmatprep.subr.mxu0 0.0
        %481 = vmatpush1.msra.mxu0 0.0
        %482 = vmatprep.subr.mxu0 0.0
        %483 = vmatpush1.msra.mxu0 0.0
        %484 = vmatprep.subr.mxu0 0.0
        %485 = vmatpush1.msra.mxu0 0.0
        %486 = vmatprep.subr.mxu0 0.0
        %487 = vmatpush1.msra.mxu0 0.0
        %488 = vmatprep.subr.mxu0 0.0
        %489 = vmatpush1.msra.mxu0 0.0
        %490 = vmatprep.subr.mxu0 0.0
        %491 = vmatpush1.msra.mxu0 0.0
        %492 = vmatprep.subr.mxu0 0.0
        %493 = vmatpush1.msra.mxu0 0.0
        %494 = vmatprep.subr.mxu0 0.0
        %495 = vmatpush1.msra.mxu0 0.0
        %496 = vmatprep.subr.mxu0 0.0
        %497 = vmatpush1.msra.mxu0 0.0
        %498 = vmatprep.subr.mxu0 0.0
        %499 = vmatpush1.msra.mxu0 0.0
        %500 = vmatprep.subr.mxu0 0.0
        %501 = vmatpush1.msra.mxu0 0.0
        %502 = vmatprep.subr.mxu0 0.0
        %503 = vmatpush1.msra.mxu0 0.0
        %504 = vmatprep.subr.mxu0 0.0
        %505 = vmatpush1.msra.mxu0 0.0
        %506 = vmatprep.subr.mxu0 0.0
        %507 = vmatpush1.msra.mxu0 0.0
        %508 = vmatprep.subr.mxu0 0.0
        %509 = vmatpush1.msra.mxu0 0.0
        %510 = vmatprep.subr.mxu0 0.0
        %511 = vmatpush1.msra.mxu0 0.0
        %512 = vmatprep.subr.mxu0 0.0
        %513 = vmatpush1.msra.mxu0 0.0
        %514 = vmatprep.subr.mxu0 0.0
        %515 = vmatpush1.msra.mxu0 0.0
        %516 = vmatprep.mubr.f32.mxu0 0.0
        %v517 = vand.u32 %v219, 4294901760
        %v518 = vsub.f32 %v219, %v517
        %v519 = vand.u32 %v518, 4294901760
        %520 = vmatmul.mubr.f32.gmra.mrb[0].mxu0 %v519
        %v521 = vpop.f32.mrb[0].mxu0
        %v522 = vadd.f32 %v448, %v521
        %v523 = vpop.f32.mrb[0].mxu0
        %524 = vdwg.mxu0
        %525 = vmatprep.subr.mxu0 0.0
        %v526 = vand.u32 %v223, 4294901760
        %v527 = vsub.f32 %v223, %v526
        %v528 = vand.u32 %v527, 4294901760
        %529 = vmatpush1.msra.mxu0 %v528
        %530 = vmatprep.subr.mxu0 0.0
        %531 = vmatpush1.msra.mxu0 0.0
        %532 = vmatprep.subr.mxu0 0.0
        %533 = vmatpush1.msra.mxu0 0.0
        %534 = vmatprep.subr.mxu0 0.0
        %535 = vmatpush1.msra.mxu0 0.0
        %536 = vmatprep.subr.mxu0 0.0
        %537 = vmatpush1.msra.mxu0 0.0
        %538 = vmatprep.subr.mxu0 0.0
        %539 = vmatpush1.msra.mxu0 0.0
        %540 = vmatprep.subr.mxu0 0.0
        %541 = vmatpush1.msra.mxu0 0.0
        %542 = vmatprep.subr.mxu0 0.0
        %543 = vmatpush1.msra.mxu0 0.0
        %544 = vmatprep.subr.mxu0 0.0
        %545 = vmatpush1.msra.mxu0 0.0
        %546 = vmatprep.subr.mxu0 0.0
        %547 = vmatpush1.msra.mxu0 0.0
        %548 = vmatprep.subr.mxu0 0.0
        %549 = vmatpush1.msra.mxu0 0.0
        %550 = vmatprep.subr.mxu0 0.0
        %551 = vmatpush1.msra.mxu0 0.0
        %552 = vmatprep.subr.mxu0 0.0
        %553 = vmatpush1.msra.mxu0 0.0
        %554 = vmatprep.subr.mxu0 0.0
        %555 = vmatpush1.msra.mxu0 0.0
        %556 = vmatprep.subr.mxu0 0.0
        %557 = vmatpush1.msra.mxu0 0.0
        %558 = vmatprep.subr.mxu0 0.0
        %559 = vmatpush1.msra.mxu0 0.0
        %560 = vmatprep.subr.mxu0 0.0
        %561 = vmatpush1.msra.mxu0 0.0
        %562 = vmatprep.subr.mxu0 0.0
        %563 = vmatpush1.msra.mxu0 0.0
        %564 = vmatprep.subr.mxu0 0.0
        %565 = vmatpush1.msra.mxu0 0.0
        %566 = vmatprep.subr.mxu0 0.0
        %567 = vmatpush1.msra.mxu0 0.0
        %568 = vmatprep.subr.mxu0 0.0
        %569 = vmatpush1.msra.mxu0 0.0
        %570 = vmatprep.subr.mxu0 0.0
        %571 = vmatpush1.msra.mxu0 0.0
        %572 = vmatprep.subr.mxu0 0.0
        %573 = vmatpush1.msra.mxu0 0.0
        %574 = vmatprep.subr.mxu0 0.0
        %575 = vmatpush1.msra.mxu0 0.0
        %576 = vmatprep.subr.mxu0 0.0
        %577 = vmatpush1.msra.mxu0 0.0
        %578 = vmatprep.subr.mxu0 0.0
        %579 = vmatpush1.msra.mxu0 0.0
        %580 = vmatprep.subr.mxu0 0.0
        %581 = vmatpush1.msra.mxu0 0.0
        %582 = vmatprep.subr.mxu0 0.0
        %583 = vmatpush1.msra.mxu0 0.0
        %584 = vmatprep.subr.mxu0 0.0
        %585 = vmatpush1.msra.mxu0 0.0
        %586 = vmatprep.subr.mxu0 0.0
        %587 = vmatpush1.msra.mxu0 0.0
        %588 = vmatprep.subr.mxu0 0.0
        %589 = vmatpush1.msra.mxu0 0.0
        %590 = vmatprep.subr.mxu0 0.0
        %591 = vmatpush1.msra.mxu0 0.0
        %592 = vmatprep.mubr.f32.mxu0 0.0
        %v593 = vand.u32 %v219, 4294901760
        %594 = vmatmul.mubr.f32.gmra.mrb[0].mxu0 %v593
        %v595 = vpop.f32.mrb[0].mxu0
        %v596 = vadd.f32 %v522, %v595
        %v597 = vpop.f32.mrb[0].mxu0
        %598 = vdwg.mxu0
        %599 = vmatprep.subr.mxu0 0.0
        %v600 = vand.u32 %v223, 4294901760
        %601 = vmatpush1.msra.mxu0 %v600
        %602 = vmatprep.subr.mxu0 0.0
        %603 = vmatpush1.msra.mxu0 0.0
        %604 = vmatprep.subr.mxu0 0.0
        %605 = vmatpush1.msra.mxu0 0.0
        %606 = vmatprep.subr.mxu0 0.0
        %607 = vmatpush1.msra.mxu0 0.0
        %608 = vmatprep.subr.mxu0 0.0
        %609 = vmatpush1.msra.mxu0 0.0
        %610 = vmatprep.subr.mxu0 0.0
        %611 = vmatpush1.msra.mxu0 0.0
        %612 = vmatprep.subr.mxu0 0.0
        %613 = vmatpush1.msra.mxu0 0.0
        %614 = vmatprep.subr.mxu0 0.0
        %615 = vmatpush1.msra.mxu0 0.0
        %616 = vmatprep.subr.mxu0 0.0
        %617 = vmatpush1.msra.mxu0 0.0
        %618 = vmatprep.subr.mxu0 0.0
        %619 = vmatpush1.msra.mxu0 0.0
        %620 = vmatprep.subr.mxu0 0.0
        %621 = vmatpush1.msra.mxu0 0.0
        %622 = vmatprep.subr.mxu0 0.0
        %623 = vmatpush1.msra.mxu0 0.0
        %624 = vmatprep.subr.mxu0 0.0
        %625 = vmatpush1.msra.mxu0 0.0
        %626 = vmatprep.subr.mxu0 0.0
        %627 = vmatpush1.msra.mxu0 0.0
        %628 = vmatprep.subr.mxu0 0.0
        %629 = vmatpush1.msra.mxu0 0.0
        %630 = vmatprep.subr.mxu0 0.0
        %631 = vmatpush1.msra.mxu0 0.0
        %632 = vmatprep.subr.mxu0 0.0
        %633 = vmatpush1.msra.mxu0 0.0
        %634 = vmatprep.subr.mxu0 0.0
        %635 = vmatpush1.msra.mxu0 0.0
        %636 = vmatprep.subr.mxu0 0.0
        %637 = vmatpush1.msra.mxu0 0.0
        %638 = vmatprep.subr.mxu0 0.0
        %639 = vmatpush1.msra.mxu0 0.0
        %640 = vmatprep.subr.mxu0 0.0
        %641 = vmatpush1.msra.mxu0 0.0
        %642 = vmatprep.subr.mxu0 0.0
        %643 = vmatpush1.msra.mxu0 0.0
        %644 = vmatprep.subr.mxu0 0.0
        %645 = vmatpush1.msra.mxu0 0.0
        %646 = vmatprep.subr.mxu0 0.0
        %647 = vmatpush1.msra.mxu0 0.0
        %648 = vmatprep.subr.mxu0 0.0
        %649 = vmatpush1.msra.mxu0 0.0
        %650 = vmatprep.subr.mxu0 0.0
        %651 = vmatpush1.msra.mxu0 0.0
        %652 = vmatprep.subr.mxu0 0.0
        %653 = vmatpush1.msra.mxu0 0.0
        %654 = vmatprep.subr.mxu0 0.0
        %655 = vmatpush1.msra.mxu0 0.0
        %656 = vmatprep.subr.mxu0 0.0
        %657 = vmatpush1.msra.mxu0 0.0
        %658 = vmatprep.subr.mxu0 0.0
        %659 = vmatpush1.msra.mxu0 0.0
        %660 = vmatprep.subr.mxu0 0.0
        %661 = vmatpush1.msra.mxu0 0.0
        %662 = vmatprep.subr.mxu0 0.0
        %663 = vmatpush1.msra.mxu0 0.0
        %664 = vmatprep.mubr.f32.mxu0 0.0
        %v665 = vand.u32 %v219, 4294901760
        %666 = vmatmul.mubr.f32.gmra.mrb[0].mxu0 %v665
        %v667 = vpop.f32.mrb[0].mxu0
        %v668 = vadd.f32 %v596, %v667
        %v669 = vpop.f32.mrb[0].mxu0
        %670 = vdwg.mxu0
        %v671 = vtanh.pop %v668
        %v672 = vld [vmem:[#allocation2] sm:$0xff]
        %v673 = vld [vmem:[#allocation2 + $0x8] sm:$0xff]
        %v674 = vld [vmem:[#allocation2 + $0x10] sm:$0xff]
        %v675 = vld [vmem:[#allocation2 + $0x18] sm:$0xff]
        %v676 = vld [vmem:[#allocation2 + $0x20] sm:$0xff]
        %v677 = vld [vmem:[#allocation2 + $0x28] sm:$0xff]
        %v678 = vld [vmem:[#allocation2 + $0x30] sm:$0xff]
        %v679 = vld [vmem:[#allocation2 + $0x38] sm:$0xff]
        %v680 = vld [vmem:[#allocation2 + $0x40] sm:$0xff]
        %v681 = vld [vmem:[#allocation2 + $0x48] sm:$0xff]
        %v682 = vld [vmem:[#allocation2 + $0x50] sm:$0xff]
        %v683 = vld [vmem:[#allocation2 + $0x58] sm:$0xff]
        %v684 = vld [vmem:[#allocation2 + $0x60] sm:$0xff]
        %v685 = vld [vmem:[#allocation2 + $0x68] sm:$0xff]
        %v686 = vld [vmem:[#allocation2 + $0x70] sm:$0xff]
        %v687 = vld [vmem:[#allocation2 + $0x78] sm:$0xff]
        %s688 = scalar_lea.vmem %s3, 1
        %v689 = vld [vmem:[%s688] sm:$0x1]
        %v691 = vlaneseq
        %v692 = vshrl.u32 %v691, 7
        %v693 = vsub.s32 0, %v692
        %v694 = vrot.slane %v689, %v693
        %696 = vmatprep.subr.mxu0 0.0
        %v697 = vand.u32 %v672, 4294901760
        %698 = vmatpush1.msra.mxu0 %v697
        %699 = vmatprep.subr.mxu0 0.0
        %v700 = vand.u32 %v673, 4294901760
        %701 = vmatpush1.msra.mxu0 %v700
        %702 = vmatprep.subr.mxu0 0.0
        %v703 = vand.u32 %v674, 4294901760
        %704 = vmatpush1.msra.mxu0 %v703
        %705 = vmatprep.subr.mxu0 0.0
        %v706 = vand.u32 %v675, 4294901760
        %707 = vmatpush1.msra.mxu0 %v706
        %708 = vmatprep.subr.mxu0 0.0
        %v709 = vand.u32 %v676, 4294901760
        %710 = vmatpush1.msra.mxu0 %v709
        %711 = vmatprep.subr.mxu0 0.0
        %v712 = vand.u32 %v677, 4294901760
        %713 = vmatpush1.msra.mxu0 %v712
        %714 = vmatprep.subr.mxu0 0.0
        %v715 = vand.u32 %v678, 4294901760
        %716 = vmatpush1.msra.mxu0 %v715
        %717 = vmatprep.subr.mxu0 0.0
        %v718 = vand.u32 %v679, 4294901760
        %719 = vmatpush1.msra.mxu0 %v718
        %720 = vmatprep.subr.mxu0 0.0
        %v721 = vand.u32 %v680, 4294901760
        %722 = vmatpush1.msra.mxu0 %v721
        %723 = vmatprep.subr.mxu0 0.0
        %v724 = vand.u32 %v681, 4294901760
        %725 = vmatpush1.msra.mxu0 %v724
        %726 = vmatprep.subr.mxu0 0.0
        %v727 = vand.u32 %v682, 4294901760
        %728 = vmatpush1.msra.mxu0 %v727
        %729 = vmatprep.subr.mxu0 0.0
        %v730 = vand.u32 %v683, 4294901760
        %731 = vmatpush1.msra.mxu0 %v730
        %732 = vmatprep.subr.mxu0 0.0
        %v733 = vand.u32 %v684, 4294901760
        %734 = vmatpush1.msra.mxu0 %v733
        %735 = vmatprep.subr.mxu0 0.0
        %v736 = vand.u32 %v685, 4294901760
        %737 = vmatpush1.msra.mxu0 %v736
        %738 = vmatprep.subr.mxu0 0.0
        %v739 = vand.u32 %v686, 4294901760
        %740 = vmatpush1.msra.mxu0 %v739
        %741 = vmatprep.subr.mxu0 0.0
        %v742 = vand.u32 %v687, 4294901760
        %743 = vmatpush1.msra.mxu0 %v742
        %744 = vmatprep.subr.mxu0 0.0
        %745 = vmatpush1.msra.mxu0 0.0
        %746 = vmatprep.subr.mxu0 0.0
        %747 = vmatpush1.msra.mxu0 0.0
        %748 = vmatprep.subr.mxu0 0.0
        %749 = vmatpush1.msra.mxu0 0.0
        %750 = vmatprep.subr.mxu0 0.0
        %751 = vmatpush1.msra.mxu0 0.0
        %752 = vmatprep.subr.mxu0 0.0
        %753 = vmatpush1.msra.mxu0 0.0
        %754 = vmatprep.subr.mxu0 0.0
        %755 = vmatpush1.msra.mxu0 0.0
        %756 = vmatprep.subr.mxu0 0.0
        %757 = vmatpush1.msra.mxu0 0.0
        %758 = vmatprep.subr.mxu0 0.0
        %759 = vmatpush1.msra.mxu0 0.0
        %760 = vmatprep.subr.mxu0 0.0
        %761 = vmatpush1.msra.mxu0 0.0
        %762 = vmatprep.subr.mxu0 0.0
        %763 = vmatpush1.msra.mxu0 0.0
        %764 = vmatprep.subr.mxu0 0.0
        %765 = vmatpush1.msra.mxu0 0.0
        %766 = vmatprep.subr.mxu0 0.0
        %767 = vmatpush1.msra.mxu0 0.0
        %768 = vmatprep.subr.mxu0 0.0
        %769 = vmatpush1.msra.mxu0 0.0
        %770 = vmatprep.subr.mxu0 0.0
        %771 = vmatpush1.msra.mxu0 0.0
        %772 = vmatprep.subr.mxu0 0.0
        %773 = vmatpush1.msra.mxu0 0.0
        %774 = vmatprep.subr.mxu0 0.0
        %775 = vmatpush1.msra.mxu0 0.0
        %776 = vmatprep.mubr.f32.mxu0 0.0
        %v777 = vand.u32 %v671, 4294901760
        %v778 = vsub.f32 %v671, %v777
        %v779 = vand.u32 %v778, 4294901760
        %v780 = vsub.f32 %v778, %v779
        %v781 = vand.u32 %v780, 4294901760
        %782 = vmatmul.mubr.f32.gmra.mrb[0].mxu0 %v781
        %v783 = vpop.f32.mrb[0].mxu0
        %v784 = vadd.f32 %v694, %v783
        %v785 = vpop.f32.mrb[0].mxu0
        %786 = vdwg.mxu0
        %787 = vmatprep.subr.mxu0 0.0
        %v788 = vand.u32 %v672, 4294901760
        %v789 = vsub.f32 %v672, %v788
        %v790 = vand.u32 %v789, 4294901760
        %v791 = vsub.f32 %v789, %v790
        %v792 = vand.u32 %v791, 4294901760
        %793 = vmatpush1.msra.mxu0 %v792
        %794 = vmatprep.subr.mxu0 0.0
        %v795 = vand.u32 %v673, 4294901760
        %v796 = vsub.f32 %v673, %v795
        %v797 = vand.u32 %v796, 4294901760
        %v798 = vsub.f32 %v796, %v797
        %v799 = vand.u32 %v798, 4294901760
        %800 = vmatpush1.msra.mxu0 %v799
        %801 = vmatprep.subr.mxu0 0.0
        %v802 = vand.u32 %v674, 4294901760
        %v803 = vsub.f32 %v674, %v802
        %v804 = vand.u32 %v803, 4294901760
        %v805 = vsub.f32 %v803, %v804
        %v806 = vand.u32 %v805, 4294901760
        %807 = vmatpush1.msra.mxu0 %v806
        %808 = vmatprep.subr.mxu0 0.0
        %v809 = vand.u32 %v675, 4294901760
        %v810 = vsub.f32 %v675, %v809
        %v811 = vand.u32 %v810, 4294901760
        %v812 = vsub.f32 %v810, %v811
        %v813 = vand.u32 %v812, 4294901760
        %814 = vmatpush1.msra.mxu0 %v813
        %815 = vmatprep.subr.mxu0 0.0
        %v816 = vand.u32 %v676, 4294901760
        %v817 = vsub.f32 %v676, %v816
        %v818 = vand.u32 %v817, 4294901760
        %v819 = vsub.f32 %v817, %v818
        %v820 = vand.u32 %v819, 4294901760
        %821 = vmatpush1.msra.mxu0 %v820
        %822 = vmatprep.subr.mxu0 0.0
        %v823 = vand.u32 %v677, 4294901760
        %v824 = vsub.f32 %v677, %v823
        %v825 = vand.u32 %v824, 4294901760
        %v826 = vsub.f32 %v824, %v825
        %v827 = vand.u32 %v826, 4294901760
        %828 = vmatpush1.msra.mxu0 %v827
        %829 = vmatprep.subr.mxu0 0.0
        %v830 = vand.u32 %v678, 4294901760
        %v831 = vsub.f32 %v678, %v830
        %v832 = vand.u32 %v831, 4294901760
        %v833 = vsub.f32 %v831, %v832
        %v834 = vand.u32 %v833, 4294901760
        %835 = vmatpush1.msra.mxu0 %v834
        %836 = vmatprep.subr.mxu0 0.0
        %v837 = vand.u32 %v679, 4294901760
        %v838 = vsub.f32 %v679, %v837
        %v839 = vand.u32 %v838, 4294901760
        %v840 = vsub.f32 %v838, %v839
        %v841 = vand.u32 %v840, 4294901760
        %842 = vmatpush1.msra.mxu0 %v841
        %843 = vmatprep.subr.mxu0 0.0
        %v844 = vand.u32 %v680, 4294901760
        %v845 = vsub.f32 %v680, %v844
        %v846 = vand.u32 %v845, 4294901760
        %v847 = vsub.f32 %v845, %v846
        %v848 = vand.u32 %v847, 4294901760
        %849 = vmatpush1.msra.mxu0 %v848
        %850 = vmatprep.subr.mxu0 0.0
        %v851 = vand.u32 %v681, 4294901760
        %v852 = vsub.f32 %v681, %v851
        %v853 = vand.u32 %v852, 4294901760
        %v854 = vsub.f32 %v852, %v853
        %v855 = vand.u32 %v854, 4294901760
        %856 = vmatpush1.msra.mxu0 %v855
        %857 = vmatprep.subr.mxu0 0.0
        %v858 = vand.u32 %v682, 4294901760
        %v859 = vsub.f32 %v682, %v858
        %v860 = vand.u32 %v859, 4294901760
        %v861 = vsub.f32 %v859, %v860
        %v862 = vand.u32 %v861, 4294901760
        %863 = vmatpush1.msra.mxu0 %v862
        %864 = vmatprep.subr.mxu0 0.0
        %v865 = vand.u32 %v683, 4294901760
        %v866 = vsub.f32 %v683, %v865
        %v867 = vand.u32 %v866, 4294901760
        %v868 = vsub.f32 %v866, %v867
        %v869 = vand.u32 %v868, 4294901760
        %870 = vmatpush1.msra.mxu0 %v869
        %871 = vmatprep.subr.mxu0 0.0
        %v872 = vand.u32 %v684, 4294901760
        %v873 = vsub.f32 %v684, %v872
        %v874 = vand.u32 %v873, 4294901760
        %v875 = vsub.f32 %v873, %v874
        %v876 = vand.u32 %v875, 4294901760
        %877 = vmatpush1.msra.mxu0 %v876
        %878 = vmatprep.subr.mxu0 0.0
        %v879 = vand.u32 %v685, 4294901760
        %v880 = vsub.f32 %v685, %v879
        %v881 = vand.u32 %v880, 4294901760
        %v882 = vsub.f32 %v880, %v881
        %v883 = vand.u32 %v882, 4294901760
        %884 = vmatpush1.msra.mxu0 %v883
        %885 = vmatprep.subr.mxu0 0.0
        %v886 = vand.u32 %v686, 4294901760
        %v887 = vsub.f32 %v686, %v886
        %v888 = vand.u32 %v887, 4294901760
        %v889 = vsub.f32 %v887, %v888
        %v890 = vand.u32 %v889, 4294901760
        %891 = vmatpush1.msra.mxu0 %v890
        %892 = vmatprep.subr.mxu0 0.0
        %v893 = vand.u32 %v687, 4294901760
        %v894 = vsub.f32 %v687, %v893
        %v895 = vand.u32 %v894, 4294901760
        %v896 = vsub.f32 %v894, %v895
        %v897 = vand.u32 %v896, 4294901760
        %898 = vmatpush1.msra.mxu0 %v897
        %899 = vmatprep.subr.mxu0 0.0
        %900 = vmatpush1.msra.mxu0 0.0
        %901 = vmatprep.subr.mxu0 0.0
        %902 = vmatpush1.msra.mxu0 0.0
        %903 = vmatprep.subr.mxu0 0.0
        %904 = vmatpush1.msra.mxu0 0.0
        %905 = vmatprep.subr.mxu0 0.0
        %906 = vmatpush1.msra.mxu0 0.0
        %907 = vmatprep.subr.mxu0 0.0
        %908 = vmatpush1.msra.mxu0 0.0
        %909 = vmatprep.subr.mxu0 0.0
        %910 = vmatpush1.msra.mxu0 0.0
        %911 = vmatprep.subr.mxu0 0.0
        %912 = vmatpush1.msra.mxu0 0.0
        %913 = vmatprep.subr.mxu0 0.0
        %914 = vmatpush1.msra.mxu0 0.0
        %915 = vmatprep.subr.mxu0 0.0
        %916 = vmatpush1.msra.mxu0 0.0
        %917 = vmatprep.subr.mxu0 0.0
        %918 = vmatpush1.msra.mxu0 0.0
        %919 = vmatprep.subr.mxu0 0.0
        %920 = vmatpush1.msra.mxu0 0.0
        %921 = vmatprep.subr.mxu0 0.0
        %922 = vmatpush1.msra.mxu0 0.0
        %923 = vmatprep.subr.mxu0 0.0
        %924 = vmatpush1.msra.mxu0 0.0
        %925 = vmatprep.subr.mxu0 0.0
        %926 = vmatpush1.msra.mxu0 0.0
        %927 = vmatprep.subr.mxu0 0.0
        %928 = vmatpush1.msra.mxu0 0.0
        %929 = vmatprep.subr.mxu0 0.0
        %930 = vmatpush1.msra.mxu0 0.0
        %931 = vmatprep.mubr.f32.mxu0 0.0
        %v932 = vand.u32 %v671, 4294901760
        %933 = vmatmul.mubr.f32.gmra.mrb[0].mxu0 %v932
        %v934 = vpop.f32.mrb[0].mxu0
        %v935 = vadd.f32 %v784, %v934
        %v936 = vpop.f32.mrb[0].mxu0
        %937 = vdwg.mxu0
        %938 = vmatprep.subr.mxu0 0.0
        %v939 = vand.u32 %v672, 4294901760
        %v940 = vsub.f32 %v672, %v939
        %941 = vmatpush1.msra.mxu0 %v940
        %942 = vmatprep.subr.mxu0 0.0
        %v943 = vand.u32 %v673, 4294901760
        %v944 = vsub.f32 %v673, %v943
        %945 = vmatpush1.msra.mxu0 %v944
        %946 = vmatprep.subr.mxu0 0.0
        %v947 = vand.u32 %v674, 4294901760
        %v948 = vsub.f32 %v674, %v947
        %949 = vmatpush1.msra.mxu0 %v948
        %950 = vmatprep.subr.mxu0 0.0
        %v951 = vand.u32 %v675, 4294901760
        %v952 = vsub.f32 %v675, %v951
        %953 = vmatpush1.msra.mxu0 %v952
        %954 = vmatprep.subr.mxu0 0.0
        %v955 = vand.u32 %v676, 4294901760
        %v956 = vsub.f32 %v676, %v955
        %957 = vmatpush1.msra.mxu0 %v956
        %958 = vmatprep.subr.mxu0 0.0
        %v959 = vand.u32 %v677, 4294901760
        %v960 = vsub.f32 %v677, %v959
        %961 = vmatpush1.msra.mxu0 %v960
        %962 = vmatprep.subr.mxu0 0.0
        %v963 = vand.u32 %v678, 4294901760
        %v964 = vsub.f32 %v678, %v963
        %965 = vmatpush1.msra.mxu0 %v964
        %966 = vmatprep.subr.mxu0 0.0
        %v967 = vand.u32 %v679, 4294901760
        %v968 = vsub.f32 %v679, %v967
        %969 = vmatpush1.msra.mxu0 %v968
        %970 = vmatprep.subr.mxu0 0.0
        %v971 = vand.u32 %v680, 4294901760
        %v972 = vsub.f32 %v680, %v971
        %973 = vmatpush1.msra.mxu0 %v972
        %974 = vmatprep.subr.mxu0 0.0
        %v975 = vand.u32 %v681, 4294901760
        %v976 = vsub.f32 %v681, %v975
        %977 = vmatpush1.msra.mxu0 %v976
        %978 = vmatprep.subr.mxu0 0.0
        %v979 = vand.u32 %v682, 4294901760
        %v980 = vsub.f32 %v682, %v979
        %981 = vmatpush1.msra.mxu0 %v980
        %982 = vmatprep.subr.mxu0 0.0
        %v983 = vand.u32 %v683, 4294901760
        %v984 = vsub.f32 %v683, %v983
        %985 = vmatpush1.msra.mxu0 %v984
        %986 = vmatprep.subr.mxu0 0.0
        %v987 = vand.u32 %v684, 4294901760
        %v988 = vsub.f32 %v684, %v987
        %989 = vmatpush1.msra.mxu0 %v988
        %990 = vmatprep.subr.mxu0 0.0
        %v991 = vand.u32 %v685, 4294901760
        %v992 = vsub.f32 %v685, %v991
        %993 = vmatpush1.msra.mxu0 %v992
        %994 = vmatprep.subr.mxu0 0.0
        %v995 = vand.u32 %v686, 4294901760
        %v996 = vsub.f32 %v686, %v995
        %997 = vmatpush1.msra.mxu0 %v996
        %998 = vmatprep.subr.mxu0 0.0
        %v999 = vand.u32 %v687, 4294901760
        %v1000 = vsub.f32 %v687, %v999
        %1001 = vmatpush1.msra.mxu0 %v1000
        %1002 = vmatprep.subr.mxu0 0.0
        %1003 = vmatpush1.msra.mxu0 0.0
        %1004 = vmatprep.subr.mxu0 0.0
        %1005 = vmatpush1.msra.mxu0 0.0
        %1006 = vmatprep.subr.mxu0 0.0
        %1007 = vmatpush1.msra.mxu0 0.0
        %1008 = vmatprep.subr.mxu0 0.0
        %1009 = vmatpush1.msra.mxu0 0.0
        %1010 = vmatprep.subr.mxu0 0.0
        %1011 = vmatpush1.msra.mxu0 0.0
        %1012 = vmatprep.subr.mxu0 0.0
        %1013 = vmatpush1.msra.mxu0 0.0
        %1014 = vmatprep.subr.mxu0 0.0
        %1015 = vmatpush1.msra.mxu0 0.0
        %1016 = vmatprep.subr.mxu0 0.0
        %1017 = vmatpush1.msra.mxu0 0.0
        %1018 = vmatprep.subr.mxu0 0.0
        %1019 = vmatpush1.msra.mxu0 0.0
        %1020 = vmatprep.subr.mxu0 0.0
        %1021 = vmatpush1.msra.mxu0 0.0
        %1022 = vmatprep.subr.mxu0 0.0
        %1023 = vmatpush1.msra.mxu0 0.0
        %1024 = vmatprep.subr.mxu0 0.0
        %1025 = vmatpush1.msra.mxu0 0.0
        %1026 = vmatprep.subr.mxu0 0.0
        %1027 = vmatpush1.msra.mxu0 0.0
        %1028 = vmatprep.subr.mxu0 0.0
        %1029 = vmatpush1.msra.mxu0 0.0
        %1030 = vmatprep.subr.mxu0 0.0
        %1031 = vmatpush1.msra.mxu0 0.0
        %1032 = vmatprep.subr.mxu0 0.0
        %1033 = vmatpush1.msra.mxu0 0.0
        %1034 = vmatprep.mubr.f32.mxu0 0.0
        %v1035 = vand.u32 %v671, 4294901760
        %v1036 = vsub.f32 %v671, %v1035
        %1037 = vmatmul.mubr.f32.gmra.mrb[0].mxu0 %v1036
        %v1038 = vpop.f32.mrb[0].mxu0
        %v1039 = vadd.f32 %v935, %v1038
        %v1040 = vpop.f32.mrb[0].mxu0
        %1041 = vdwg.mxu0
        %1042 = vmatprep.subr.mxu0 0.0
        %v1043 = vand.u32 %v672, 4294901760
        %1044 = vmatpush1.msra.mxu0 %v1043
        %1045 = vmatprep.subr.mxu0 0.0
        %v1046 = vand.u32 %v673, 4294901760
        %1047 = vmatpush1.msra.mxu0 %v1046
        %1048 = vmatprep.subr.mxu0 0.0
        %v1049 = vand.u32 %v674, 4294901760
        %1050 = vmatpush1.msra.mxu0 %v1049
        %1051 = vmatprep.subr.mxu0 0.0
        %v1052 = vand.u32 %v675, 4294901760
        %1053 = vmatpush1.msra.mxu0 %v1052
        %1054 = vmatprep.subr.mxu0 0.0
        %v1055 = vand.u32 %v676, 4294901760
        %1056 = vmatpush1.msra.mxu0 %v1055
        %1057 = vmatprep.subr.mxu0 0.0
        %v1058 = vand.u32 %v677, 4294901760
        %1059 = vmatpush1.msra.mxu0 %v1058
        %1060 = vmatprep.subr.mxu0 0.0
        %v1061 = vand.u32 %v678, 4294901760
        %1062 = vmatpush1.msra.mxu0 %v1061
        %1063 = vmatprep.subr.mxu0 0.0
        %v1064 = vand.u32 %v679, 4294901760
        %1065 = vmatpush1.msra.mxu0 %v1064
        %1066 = vmatprep.subr.mxu0 0.0
        %v1067 = vand.u32 %v680, 4294901760
        %1068 = vmatpush1.msra.mxu0 %v1067
        %1069 = vmatprep.subr.mxu0 0.0
        %v1070 = vand.u32 %v681, 4294901760
        %1071 = vmatpush1.msra.mxu0 %v1070
        %1072 = vmatprep.subr.mxu0 0.0
        %v1073 = vand.u32 %v682, 4294901760
        %1074 = vmatpush1.msra.mxu0 %v1073
        %1075 = vmatprep.subr.mxu0 0.0
        %v1076 = vand.u32 %v683, 4294901760
        %1077 = vmatpush1.msra.mxu0 %v1076
        %1078 = vmatprep.subr.mxu0 0.0
        %v1079 = vand.u32 %v684, 4294901760
        %1080 = vmatpush1.msra.mxu0 %v1079
        %1081 = vmatprep.subr.mxu0 0.0
        %v1082 = vand.u32 %v685, 4294901760
        %1083 = vmatpush1.msra.mxu0 %v1082
        %1084 = vmatprep.subr.mxu0 0.0
        %v1085 = vand.u32 %v686, 4294901760
        %1086 = vmatpush1.msra.mxu0 %v1085
        %1087 = vmatprep.subr.mxu0 0.0
        %v1088 = vand.u32 %v687, 4294901760
        %1089 = vmatpush1.msra.mxu0 %v1088
        %1090 = vmatprep.subr.mxu0 0.0
        %1091 = vmatpush1.msra.mxu0 0.0
        %1092 = vmatprep.subr.mxu0 0.0
        %1093 = vmatpush1.msra.mxu0 0.0
        %1094 = vmatprep.subr.mxu0 0.0
        %1095 = vmatpush1.msra.mxu0 0.0
        %1096 = vmatprep.subr.mxu0 0.0
        %1097 = vmatpush1.msra.mxu0 0.0
        %1098 = vmatprep.subr.mxu0 0.0
        %1099 = vmatpush1.msra.mxu0 0.0
        %1100 = vmatprep.subr.mxu0 0.0
        %1101 = vmatpush1.msra.mxu0 0.0
        %1102 = vmatprep.subr.mxu0 0.0
        %1103 = vmatpush1.msra.mxu0 0.0
        %1104 = vmatprep.subr.mxu0 0.0
        %1105 = vmatpush1.msra.mxu0 0.0
        %1106 = vmatprep.subr.mxu0 0.0
        %1107 = vmatpush1.msra.mxu0 0.0
        %1108 = vmatprep.subr.mxu0 0.0
        %1109 = vmatpush1.msra.mxu0 0.0
        %1110 = vmatprep.subr.mxu0 0.0
        %1111 = vmatpush1.msra.mxu0 0.0
        %1112 = vmatprep.subr.mxu0 0.0
        %1113 = vmatpush1.msra.mxu0 0.0
        %1114 = vmatprep.subr.mxu0 0.0
        %1115 = vmatpush1.msra.mxu0 0.0
        %1116 = vmatprep.subr.mxu0 0.0
        %1117 = vmatpush1.msra.mxu0 0.0
        %1118 = vmatprep.subr.mxu0 0.0
        %1119 = vmatpush1.msra.mxu0 0.0
        %1120 = vmatprep.subr.mxu0 0.0
        %1121 = vmatpush1.msra.mxu0 0.0
        %1122 = vmatprep.mubr.f32.mxu0 0.0
        %v1123 = vand.u32 %v671, 4294901760
        %v1124 = vsub.f32 %v671, %v1123
        %v1125 = vand.u32 %v1124, 4294901760
        %1126 = vmatmul.mubr.f32.gmra.mrb[0].mxu0 %v1125
        %v1127 = vpop.f32.mrb[0].mxu0
        %v1128 = vadd.f32 %v1039, %v1127
        %v1129 = vpop.f32.mrb[0].mxu0
        %1130 = vdwg.mxu0
        %1131 = vmatprep.subr.mxu0 0.0
        %v1132 = vand.u32 %v672, 4294901760
        %v1133 = vsub.f32 %v672, %v1132
        %v1134 = vand.u32 %v1133, 4294901760
        %1135 = vmatpush1.msra.mxu0 %v1134
        %1136 = vmatprep.subr.mxu0 0.0
        %v1137 = vand.u32 %v673, 4294901760
        %v1138 = vsub.f32 %v673, %v1137
        %v1139 = vand.u32 %v1138, 4294901760
        %1140 = vmatpush1.msra.mxu0 %v1139
        %1141 = vmatprep.subr.mxu0 0.0
        %v1142 = vand.u32 %v674, 4294901760
        %v1143 = vsub.f32 %v674, %v1142
        %v1144 = vand.u32 %v1143, 4294901760
        %1145 = vmatpush1.msra.mxu0 %v1144
        %1146 = vmatprep.subr.mxu0 0.0
        %v1147 = vand.u32 %v675, 4294901760
        %v1148 = vsub.f32 %v675, %v1147
        %v1149 = vand.u32 %v1148, 4294901760
        %1150 = vmatpush1.msra.mxu0 %v1149
        %1151 = vmatprep.subr.mxu0 0.0
        %v1152 = vand.u32 %v676, 4294901760
        %v1153 = vsub.f32 %v676, %v1152
        %v1154 = vand.u32 %v1153, 4294901760
        %1155 = vmatpush1.msra.mxu0 %v1154
        %1156 = vmatprep.subr.mxu0 0.0
        %v1157 = vand.u32 %v677, 4294901760
        %v1158 = vsub.f32 %v677, %v1157
        %v1159 = vand.u32 %v1158, 4294901760
        %1160 = vmatpush1.msra.mxu0 %v1159
        %1161 = vmatprep.subr.mxu0 0.0
        %v1162 = vand.u32 %v678, 4294901760
        %v1163 = vsub.f32 %v678, %v1162
        %v1164 = vand.u32 %v1163, 4294901760
        %1165 = vmatpush1.msra.mxu0 %v1164
        %1166 = vmatprep.subr.mxu0 0.0
        %v1167 = vand.u32 %v679, 4294901760
        %v1168 = vsub.f32 %v679, %v1167
        %v1169 = vand.u32 %v1168, 4294901760
        %1170 = vmatpush1.msra.mxu0 %v1169
        %1171 = vmatprep.subr.mxu0 0.0
        %v1172 = vand.u32 %v680, 4294901760
        %v1173 = vsub.f32 %v680, %v1172
        %v1174 = vand.u32 %v1173, 4294901760
        %1175 = vmatpush1.msra.mxu0 %v1174
        %1176 = vmatprep.subr.mxu0 0.0
        %v1177 = vand.u32 %v681, 4294901760
        %v1178 = vsub.f32 %v681, %v1177
        %v1179 = vand.u32 %v1178, 4294901760
        %1180 = vmatpush1.msra.mxu0 %v1179
        %1181 = vmatprep.subr.mxu0 0.0
        %v1182 = vand.u32 %v682, 4294901760
        %v1183 = vsub.f32 %v682, %v1182
        %v1184 = vand.u32 %v1183, 4294901760
        %1185 = vmatpush1.msra.mxu0 %v1184
        %1186 = vmatprep.subr.mxu0 0.0
        %v1187 = vand.u32 %v683, 4294901760
        %v1188 = vsub.f32 %v683, %v1187
        %v1189 = vand.u32 %v1188, 4294901760
        %1190 = vmatpush1.msra.mxu0 %v1189
        %1191 = vmatprep.subr.mxu0 0.0
        %v1192 = vand.u32 %v684, 4294901760
        %v1193 = vsub.f32 %v684, %v1192
        %v1194 = vand.u32 %v1193, 4294901760
        %1195 = vmatpush1.msra.mxu0 %v1194
        %1196 = vmatprep.subr.mxu0 0.0
        %v1197 = vand.u32 %v685, 4294901760
        %v1198 = vsub.f32 %v685, %v1197
        %v1199 = vand.u32 %v1198, 4294901760
        %1200 = vmatpush1.msra.mxu0 %v1199
        %1201 = vmatprep.subr.mxu0 0.0
        %v1202 = vand.u32 %v686, 4294901760
        %v1203 = vsub.f32 %v686, %v1202
        %v1204 = vand.u32 %v1203, 4294901760
        %1205 = vmatpush1.msra.mxu0 %v1204
        %1206 = vmatprep.subr.mxu0 0.0
        %v1207 = vand.u32 %v687, 4294901760
        %v1208 = vsub.f32 %v687, %v1207
        %v1209 = vand.u32 %v1208, 4294901760
        %1210 = vmatpush1.msra.mxu0 %v1209
        %1211 = vmatprep.subr.mxu0 0.0
        %1212 = vmatpush1.msra.mxu0 0.0
        %1213 = vmatprep.subr.mxu0 0.0
        %1214 = vmatpush1.msra.mxu0 0.0
        %1215 = vmatprep.subr.mxu0 0.0
        %1216 = vmatpush1.msra.mxu0 0.0
        %1217 = vmatprep.subr.mxu0 0.0
        %1218 = vmatpush1.msra.mxu0 0.0
        %1219 = vmatprep.subr.mxu0 0.0
        %1220 = vmatpush1.msra.mxu0 0.0
        %1221 = vmatprep.subr.mxu0 0.0
        %1222 = vmatpush1.msra.mxu0 0.0
        %1223 = vmatprep.subr.mxu0 0.0
        %1224 = vmatpush1.msra.mxu0 0.0
        %1225 = vmatprep.subr.mxu0 0.0
        %1226 = vmatpush1.msra.mxu0 0.0
        %1227 = vmatprep.subr.mxu0 0.0
        %1228 = vmatpush1.msra.mxu0 0.0
        %1229 = vmatprep.subr.mxu0 0.0
        %1230 = vmatpush1.msra.mxu0 0.0
        %1231 = vmatprep.subr.mxu0 0.0
        %1232 = vmatpush1.msra.mxu0 0.0
        %1233 = vmatprep.subr.mxu0 0.0
        %1234 = vmatpush1.msra.mxu0 0.0
        %1235 = vmatprep.subr.mxu0 0.0
        %1236 = vmatpush1.msra.mxu0 0.0
        %1237 = vmatprep.subr.mxu0 0.0
        %1238 = vmatpush1.msra.mxu0 0.0
        %1239 = vmatprep.subr.mxu0 0.0
        %1240 = vmatpush1.msra.mxu0 0.0
        %1241 = vmatprep.subr.mxu0 0.0
        %1242 = vmatpush1.msra.mxu0 0.0
        %1243 = vmatprep.mubr.f32.mxu0 0.0
        %v1244 = vand.u32 %v671, 4294901760
        %1245 = vmatmul.mubr.f32.gmra.mrb[0].mxu0 %v1244
        %v1246 = vpop.f32.mrb[0].mxu0
        %v1247 = vadd.f32 %v1128, %v1246
        %v1248 = vpop.f32.mrb[0].mxu0
        %1249 = vdwg.mxu0
        %1250 = vmatprep.subr.mxu0 0.0
        %v1251 = vand.u32 %v672, 4294901760
        %1252 = vmatpush1.msra.mxu0 %v1251
        %1253 = vmatprep.subr.mxu0 0.0
        %v1254 = vand.u32 %v673, 4294901760
        %1255 = vmatpush1.msra.mxu0 %v1254
        %1256 = vmatprep.subr.mxu0 0.0
        %v1257 = vand.u32 %v674, 4294901760
        %1258 = vmatpush1.msra.mxu0 %v1257
        %1259 = vmatprep.subr.mxu0 0.0
        %v1260 = vand.u32 %v675, 4294901760
        %1261 = vmatpush1.msra.mxu0 %v1260
        %1262 = vmatprep.subr.mxu0 0.0
        %v1263 = vand.u32 %v676, 4294901760
        %1264 = vmatpush1.msra.mxu0 %v1263
        %1265 = vmatprep.subr.mxu0 0.0
        %v1266 = vand.u32 %v677, 4294901760
        %1267 = vmatpush1.msra.mxu0 %v1266
        %1268 = vmatprep.subr.mxu0 0.0
        %v1269 = vand.u32 %v678, 4294901760
        %1270 = vmatpush1.msra.mxu0 %v1269
        %1271 = vmatprep.subr.mxu0 0.0
        %v1272 = vand.u32 %v679, 4294901760
        %1273 = vmatpush1.msra.mxu0 %v1272
        %1274 = vmatprep.subr.mxu0 0.0
        %v1275 = vand.u32 %v680, 4294901760
        %1276 = vmatpush1.msra.mxu0 %v1275
        %1277 = vmatprep.subr.mxu0 0.0
        %v1278 = vand.u32 %v681, 4294901760
        %1279 = vmatpush1.msra.mxu0 %v1278
        %1280 = vmatprep.subr.mxu0 0.0
        %v1281 = vand.u32 %v682, 4294901760
        %1282 = vmatpush1.msra.mxu0 %v1281
        %1283 = vmatprep.subr.mxu0 0.0
        %v1284 = vand.u32 %v683, 4294901760
        %1285 = vmatpush1.msra.mxu0 %v1284
        %1286 = vmatprep.subr.mxu0 0.0
        %v1287 = vand.u32 %v684, 4294901760
        %1288 = vmatpush1.msra.mxu0 %v1287
        %1289 = vmatprep.subr.mxu0 0.0
        %v1290 = vand.u32 %v685, 4294901760
        %1291 = vmatpush1.msra.mxu0 %v1290
        %1292 = vmatprep.subr.mxu0 0.0
        %v1293 = vand.u32 %v686, 4294901760
        %1294 = vmatpush1.msra.mxu0 %v1293
        %1295 = vmatprep.subr.mxu0 0.0
        %v1296 = vand.u32 %v687, 4294901760
        %1297 = vmatpush1.msra.mxu0 %v1296
        %1298 = vmatprep.subr.mxu0 0.0
        %1299 = vmatpush1.msra.mxu0 0.0
        %1300 = vmatprep.subr.mxu0 0.0
        %1301 = vmatpush1.msra.mxu0 0.0
        %1302 = vmatprep.subr.mxu0 0.0
        %1303 = vmatpush1.msra.mxu0 0.0
        %1304 = vmatprep.subr.mxu0 0.0
        %1305 = vmatpush1.msra.mxu0 0.0
        %1306 = vmatprep.subr.mxu0 0.0
        %1307 = vmatpush1.msra.mxu0 0.0
        %1308 = vmatprep.subr.mxu0 0.0
        %1309 = vmatpush1.msra.mxu0 0.0
        %1310 = vmatprep.subr.mxu0 0.0
        %1311 = vmatpush1.msra.mxu0 0.0
        %1312 = vmatprep.subr.mxu0 0.0
        %1313 = vmatpush1.msra.mxu0 0.0
        %1314 = vmatprep.subr.mxu0 0.0
        %1315 = vmatpush1.msra.mxu0 0.0
        %1316 = vmatprep.subr.mxu0 0.0
        %1317 = vmatpush1.msra.mxu0 0.0
        %1318 = vmatprep.subr.mxu0 0.0
        %1319 = vmatpush1.msra.mxu0 0.0
        %1320 = vmatprep.subr.mxu0 0.0
        %1321 = vmatpush1.msra.mxu0 0.0
        %1322 = vmatprep.subr.mxu0 0.0
        %1323 = vmatpush1.msra.mxu0 0.0
        %1324 = vmatprep.subr.mxu0 0.0
        %1325 = vmatpush1.msra.mxu0 0.0
        %1326 = vmatprep.subr.mxu0 0.0
        %1327 = vmatpush1.msra.mxu0 0.0
        %1328 = vmatprep.subr.mxu0 0.0
        %1329 = vmatpush1.msra.mxu0 0.0
        %1330 = vmatprep.mubr.f32.mxu0 0.0
        %v1331 = vand.u32 %v671, 4294901760
        %1332 = vmatmul.mubr.f32.gmra.mrb[0].mxu0 %v1331
        %v1333 = vpop.f32.mrb[0].mxu0
        %v1334 = vadd.f32 %v1247, %v1333
        %v1335 = vpop.f32.mrb[0].mxu0
        %1336 = vdwg.mxu0
        %v1337 = vtanh.pop %v1334
        %s1338 = scalar_lea.vmem [#allocation2], 128
        %v1339 = vld [vmem:[%s1338] sm:$0xff]
        %v1340 = vld [vmem:[%s1338 + $0x8] sm:$0xff]
        %v1341 = vld [vmem:[%s1338 + $0x10] sm:$0xff]
        %v1342 = vld [vmem:[%s1338 + $0x18] sm:$0xff]
        %v1343 = vld [vmem:[%s1338 + $0x20] sm:$0xff]
        %v1344 = vld [vmem:[%s1338 + $0x28] sm:$0xff]
        %v1345 = vld [vmem:[%s1338 + $0x30] sm:$0xff]
        %v1346 = vld [vmem:[%s1338 + $0x38] sm:$0xff]
        %v1347 = vld [vmem:[%s1338 + $0x40] sm:$0xff]
        %v1348 = vld [vmem:[%s1338 + $0x48] sm:$0xff]
        %v1349 = vld [vmem:[%s1338 + $0x50] sm:$0xff]
        %v1350 = vld [vmem:[%s1338 + $0x58] sm:$0xff]
        %v1351 = vld [vmem:[%s1338 + $0x60] sm:$0xff]
        %v1352 = vld [vmem:[%s1338 + $0x68] sm:$0xff]
        %v1353 = vld [vmem:[%s1338 + $0x70] sm:$0xff]
        %v1354 = vld [vmem:[%s1338 + $0x78] sm:$0xff]
        %s1355 = scalar_lea.vmem %s3, 2
        %v1356 = vld [vmem:[%s1355] sm:$0x1]
        %v1358 = vlaneseq
        %v1359 = vshrl.u32 %v1358, 7
        %v1360 = vsub.s32 0, %v1359
        %v1361 = vrot.slane %v1356, %v1360
        %1363 = vmatprep.subr.mxu0 0.0
        %v1364 = vand.u32 %v1339, 4294901760
        %1365 = vmatpush1.msra.mxu0 %v1364
        %1366 = vmatprep.subr.mxu0 0.0
        %v1367 = vand.u32 %v1340, 4294901760
        %1368 = vmatpush1.msra.mxu0 %v1367
        %1369 = vmatprep.subr.mxu0 0.0
        %v1370 = vand.u32 %v1341, 4294901760
        %1371 = vmatpush1.msra.mxu0 %v1370
        %1372 = vmatprep.subr.mxu0 0.0
        %v1373 = vand.u32 %v1342, 4294901760
        %1374 = vmatpush1.msra.mxu0 %v1373
        %1375 = vmatprep.subr.mxu0 0.0
        %v1376 = vand.u32 %v1343, 4294901760
        %1377 = vmatpush1.msra.mxu0 %v1376
        %1378 = vmatprep.subr.mxu0 0.0
        %v1379 = vand.u32 %v1344, 4294901760
        %1380 = vmatpush1.msra.mxu0 %v1379
        %1381 = vmatprep.subr.mxu0 0.0
        %v1382 = vand.u32 %v1345, 4294901760
        %1383 = vmatpush1.msra.mxu0 %v1382
        %1384 = vmatprep.subr.mxu0 0.0
        %v1385 = vand.u32 %v1346, 4294901760
        %1386 = vmatpush1.msra.mxu0 %v1385
        %1387 = vmatprep.subr.mxu0 0.0
        %v1388 = vand.u32 %v1347, 4294901760
        %1389 = vmatpush1.msra.mxu0 %v1388
        %1390 = vmatprep.subr.mxu0 0.0
        %v1391 = vand.u32 %v1348, 4294901760
        %1392 = vmatpush1.msra.mxu0 %v1391
        %1393 = vmatprep.subr.mxu0 0.0
        %v1394 = vand.u32 %v1349, 4294901760
        %1395 = vmatpush1.msra.mxu0 %v1394
        %1396 = vmatprep.subr.mxu0 0.0
        %v1397 = vand.u32 %v1350, 4294901760
        %1398 = vmatpush1.msra.mxu0 %v1397
        %1399 = vmatprep.subr.mxu0 0.0
        %v1400 = vand.u32 %v1351, 4294901760
        %1401 = vmatpush1.msra.mxu0 %v1400
        %1402 = vmatprep.subr.mxu0 0.0
        %v1403 = vand.u32 %v1352, 4294901760
        %1404 = vmatpush1.msra.mxu0 %v1403
        %1405 = vmatprep.subr.mxu0 0.0
        %v1406 = vand.u32 %v1353, 4294901760
        %1407 = vmatpush1.msra.mxu0 %v1406
        %1408 = vmatprep.subr.mxu0 0.0
        %v1409 = vand.u32 %v1354, 4294901760
        %1410 = vmatpush1.msra.mxu0 %v1409
        %1411 = vmatprep.subr.mxu0 0.0
        %1412 = vmatpush1.msra.mxu0 0.0
        %1413 = vmatprep.subr.mxu0 0.0
        %1414 = vmatpush1.msra.mxu0 0.0
        %1415 = vmatprep.subr.mxu0 0.0
        %1416 = vmatpush1.msra.mxu0 0.0
        %1417 = vmatprep.subr.mxu0 0.0
        %1418 = vmatpush1.msra.mxu0 0.0
        %1419 = vmatprep.subr.mxu0 0.0
        %1420 = vmatpush1.msra.mxu0 0.0
        %1421 = vmatprep.subr.mxu0 0.0
        %1422 = vmatpush1.msra.mxu0 0.0
        %1423 = vmatprep.subr.mxu0 0.0
        %1424 = vmatpush1.msra.mxu0 0.0
        %1425 = vmatprep.subr.mxu0 0.0
        %1426 = vmatpush1.msra.mxu0 0.0
        %1427 = vmatprep.subr.mxu0 0.0
        %1428 = vmatpush1.msra.mxu0 0.0
        %1429 = vmatprep.subr.mxu0 0.0
        %1430 = vmatpush1.msra.mxu0 0.0
        %1431 = vmatprep.subr.mxu0 0.0
        %1432 = vmatpush1.msra.mxu0 0.0
        %1433 = vmatprep.subr.mxu0 0.0
        %1434 = vmatpush1.msra.mxu0 0.0
        %1435 = vmatprep.subr.mxu0 0.0
        %1436 = vmatpush1.msra.mxu0 0.0
        %1437 = vmatprep.subr.mxu0 0.0
        %1438 = vmatpush1.msra.mxu0 0.0
        %1439 = vmatprep.subr.mxu0 0.0
        %1440 = vmatpush1.msra.mxu0 0.0
        %1441 = vmatprep.subr.mxu0 0.0
        %1442 = vmatpush1.msra.mxu0 0.0
        %1443 = vmatprep.mubr.f32.mxu0 0.0
        %v1444 = vand.u32 %v1337, 4294901760
        %v1445 = vsub.f32 %v1337, %v1444
        %v1446 = vand.u32 %v1445, 4294901760
        %v1447 = vsub.f32 %v1445, %v1446
        %v1448 = vand.u32 %v1447, 4294901760
        %1449 = vmatmul.mubr.f32.gmra.mrb[0].mxu0 %v1448
        %v1450 = vpop.f32.mrb[0].mxu0
        %v1451 = vadd.f32 %v1361, %v1450
        %v1452 = vpop.f32.mrb[0].mxu0
        %1453 = vdwg.mxu0
        %1454 = vmatprep.subr.mxu0 0.0
        %v1455 = vand.u32 %v1339, 4294901760
        %v1456 = vsub.f32 %v1339, %v1455
        %v1457 = vand.u32 %v1456, 4294901760
        %v1458 = vsub.f32 %v1456, %v1457
        %v1459 = vand.u32 %v1458, 4294901760
        %1460 = vmatpush1.msra.mxu0 %v1459
        %1461 = vmatprep.subr.mxu0 0.0
        %v1462 = vand.u32 %v1340, 4294901760
        %v1463 = vsub.f32 %v1340, %v1462
        %v1464 = vand.u32 %v1463, 4294901760
        %v1465 = vsub.f32 %v1463, %v1464
        %v1466 = vand.u32 %v1465, 4294901760
        %1467 = vmatpush1.msra.mxu0 %v1466
        %1468 = vmatprep.subr.mxu0 0.0
        %v1469 = vand.u32 %v1341, 4294901760
        %v1470 = vsub.f32 %v1341, %v1469
        %v1471 = vand.u32 %v1470, 4294901760
        %v1472 = vsub.f32 %v1470, %v1471
        %v1473 = vand.u32 %v1472, 4294901760
        %1474 = vmatpush1.msra.mxu0 %v1473
        %1475 = vmatprep.subr.mxu0 0.0
        %v1476 = vand.u32 %v1342, 4294901760
        %v1477 = vsub.f32 %v1342, %v1476
        %v1478 = vand.u32 %v1477, 4294901760
        %v1479 = vsub.f32 %v1477, %v1478
        %v1480 = vand.u32 %v1479, 4294901760
        %1481 = vmatpush1.msra.mxu0 %v1480
        %1482 = vmatprep.subr.mxu0 0.0
        %v1483 = vand.u32 %v1343, 4294901760
        %v1484 = vsub.f32 %v1343, %v1483
        %v1485 = vand.u32 %v1484, 4294901760
        %v1486 = vsub.f32 %v1484, %v1485
        %v1487 = vand.u32 %v1486, 4294901760
        %1488 = vmatpush1.msra.mxu0 %v1487
        %1489 = vmatprep.subr.mxu0 0.0
        %v1490 = vand.u32 %v1344, 4294901760
        %v1491 = vsub.f32 %v1344, %v1490
        %v1492 = vand.u32 %v1491, 4294901760
        %v1493 = vsub.f32 %v1491, %v1492
        %v1494 = vand.u32 %v1493, 4294901760
        %1495 = vmatpush1.msra.mxu0 %v1494
        %1496 = vmatprep.subr.mxu0 0.0
        %v1497 = vand.u32 %v1345, 4294901760
        %v1498 = vsub.f32 %v1345, %v1497
        %v1499 = vand.u32 %v1498, 4294901760
        %v1500 = vsub.f32 %v1498, %v1499
        %v1501 = vand.u32 %v1500, 4294901760
        %1502 = vmatpush1.msra.mxu0 %v1501
        %1503 = vmatprep.subr.mxu0 0.0
        %v1504 = vand.u32 %v1346, 4294901760
        %v1505 = vsub.f32 %v1346, %v1504
        %v1506 = vand.u32 %v1505, 4294901760
        %v1507 = vsub.f32 %v1505, %v1506
        %v1508 = vand.u32 %v1507, 4294901760
        %1509 = vmatpush1.msra.mxu0 %v1508
        %1510 = vmatprep.subr.mxu0 0.0
        %v1511 = vand.u32 %v1347, 4294901760
        %v1512 = vsub.f32 %v1347, %v1511
        %v1513 = vand.u32 %v1512, 4294901760
        %v1514 = vsub.f32 %v1512, %v1513
        %v1515 = vand.u32 %v1514, 4294901760
        %1516 = vmatpush1.msra.mxu0 %v1515
        %1517 = vmatprep.subr.mxu0 0.0
        %v1518 = vand.u32 %v1348, 4294901760
        %v1519 = vsub.f32 %v1348, %v1518
        %v1520 = vand.u32 %v1519, 4294901760
        %v1521 = vsub.f32 %v1519, %v1520
        %v1522 = vand.u32 %v1521, 4294901760
        %1523 = vmatpush1.msra.mxu0 %v1522
        %1524 = vmatprep.subr.mxu0 0.0
        %v1525 = vand.u32 %v1349, 4294901760
        %v1526 = vsub.f32 %v1349, %v1525
        %v1527 = vand.u32 %v1526, 4294901760
        %v1528 = vsub.f32 %v1526, %v1527
        %v1529 = vand.u32 %v1528, 4294901760
        %1530 = vmatpush1.msra.mxu0 %v1529
        %1531 = vmatprep.subr.mxu0 0.0
        %v1532 = vand.u32 %v1350, 4294901760
        %v1533 = vsub.f32 %v1350, %v1532
        %v1534 = vand.u32 %v1533, 4294901760
        %v1535 = vsub.f32 %v1533, %v1534
        %v1536 = vand.u32 %v1535, 4294901760
        %1537 = vmatpush1.msra.mxu0 %v1536
        %1538 = vmatprep.subr.mxu0 0.0
        %v1539 = vand.u32 %v1351, 4294901760
        %v1540 = vsub.f32 %v1351, %v1539
        %v1541 = vand.u32 %v1540, 4294901760
        %v1542 = vsub.f32 %v1540, %v1541
        %v1543 = vand.u32 %v1542, 4294901760
        %1544 = vmatpush1.msra.mxu0 %v1543
        %1545 = vmatprep.subr.mxu0 0.0
        %v1546 = vand.u32 %v1352, 4294901760
        %v1547 = vsub.f32 %v1352, %v1546
        %v1548 = vand.u32 %v1547, 4294901760
        %v1549 = vsub.f32 %v1547, %v1548
        %v1550 = vand.u32 %v1549, 4294901760
        %1551 = vmatpush1.msra.mxu0 %v1550
        %1552 = vmatprep.subr.mxu0 0.0
        %v1553 = vand.u32 %v1353, 4294901760
        %v1554 = vsub.f32 %v1353, %v1553
        %v1555 = vand.u32 %v1554, 4294901760
        %v1556 = vsub.f32 %v1554, %v1555
        %v1557 = vand.u32 %v1556, 4294901760
        %1558 = vmatpush1.msra.mxu0 %v1557
        %1559 = vmatprep.subr.mxu0 0.0
        %v1560 = vand.u32 %v1354, 4294901760
        %v1561 = vsub.f32 %v1354, %v1560
        %v1562 = vand.u32 %v1561, 4294901760
        %v1563 = vsub.f32 %v1561, %v1562
        %v1564 = vand.u32 %v1563, 4294901760
        %1565 = vmatpush1.msra.mxu0 %v1564
        %1566 = vmatprep.subr.mxu0 0.0
        %1567 = vmatpush1.msra.mxu0 0.0
        %1568 = vmatprep.subr.mxu0 0.0
        %1569 = vmatpush1.msra.mxu0 0.0
        %1570 = vmatprep.subr.mxu0 0.0
        %1571 = vmatpush1.msra.mxu0 0.0
        %1572 = vmatprep.subr.mxu0 0.0
        %1573 = vmatpush1.msra.mxu0 0.0
        %1574 = vmatprep.subr.mxu0 0.0
        %1575 = vmatpush1.msra.mxu0 0.0
        %1576 = vmatprep.subr.mxu0 0.0
        %1577 = vmatpush1.msra.mxu0 0.0
        %1578 = vmatprep.subr.mxu0 0.0
        %1579 = vmatpush1.msra.mxu0 0.0
        %1580 = vmatprep.subr.mxu0 0.0
        %1581 = vmatpush1.msra.mxu0 0.0
        %1582 = vmatprep.subr.mxu0 0.0
        %1583 = vmatpush1.msra.mxu0 0.0
        %1584 = vmatprep.subr.mxu0 0.0
        %1585 = vmatpush1.msra.mxu0 0.0
        %1586 = vmatprep.subr.mxu0 0.0
        %1587 = vmatpush1.msra.mxu0 0.0
        %1588 = vmatprep.subr.mxu0 0.0
        %1589 = vmatpush1.msra.mxu0 0.0
        %1590 = vmatprep.subr.mxu0 0.0
        %1591 = vmatpush1.msra.mxu0 0.0
        %1592 = vmatprep.subr.mxu0 0.0
        %1593 = vmatpush1.msra.mxu0 0.0
        %1594 = vmatprep.subr.mxu0 0.0
        %1595 = vmatpush1.msra.mxu0 0.0
        %1596 = vmatprep.subr.mxu0 0.0
        %1597 = vmatpush1.msra.mxu0 0.0
        %1598 = vmatprep.mubr.f32.mxu0 0.0
        %v1599 = vand.u32 %v1337, 4294901760
        %1600 = vmatmul.mubr.f32.gmra.mrb[0].mxu0 %v1599
        %v1601 = vpop.f32.mrb[0].mxu0
        %v1602 = vadd.f32 %v1451, %v1601
        %v1603 = vpop.f32.mrb[0].mxu0
        %1604 = vdwg.mxu0
        %1605 = vmatprep.subr.mxu0 0.0
        %v1606 = vand.u32 %v1339, 4294901760
        %v1607 = vsub.f32 %v1339, %v1606
        %1608 = vmatpush1.msra.mxu0 %v1607
        %1609 = vmatprep.subr.mxu0 0.0
        %v1610 = vand.u32 %v1340, 4294901760
        %v1611 = vsub.f32 %v1340, %v1610
        %1612 = vmatpush1.msra.mxu0 %v1611
        %1613 = vmatprep.subr.mxu0 0.0
        %v1614 = vand.u32 %v1341, 4294901760
        %v1615 = vsub.f32 %v1341, %v1614
        %1616 = vmatpush1.msra.mxu0 %v1615
        %1617 = vmatprep.subr.mxu0 0.0
        %v1618 = vand.u32 %v1342, 4294901760
        %v1619 = vsub.f32 %v1342, %v1618
        %1620 = vmatpush1.msra.mxu0 %v1619
        %1621 = vmatprep.subr.mxu0 0.0
        %v1622 = vand.u32 %v1343, 4294901760
        %v1623 = vsub.f32 %v1343, %v1622
        %1624 = vmatpush1.msra.mxu0 %v1623
        %1625 = vmatprep.subr.mxu0 0.0
        %v1626 = vand.u32 %v1344, 4294901760
        %v1627 = vsub.f32 %v1344, %v1626
        %1628 = vmatpush1.msra.mxu0 %v1627
        %1629 = vmatprep.subr.mxu0 0.0
        %v1630 = vand.u32 %v1345, 4294901760
        %v1631 = vsub.f32 %v1345, %v1630
        %1632 = vmatpush1.msra.mxu0 %v1631
        %1633 = vmatprep.subr.mxu0 0.0
        %v1634 = vand.u32 %v1346, 4294901760
        %v1635 = vsub.f32 %v1346, %v1634
        %1636 = vmatpush1.msra.mxu0 %v1635
        %1637 = vmatprep.subr.mxu0 0.0
        %v1638 = vand.u32 %v1347, 4294901760
        %v1639 = vsub.f32 %v1347, %v1638
        %1640 = vmatpush1.msra.mxu0 %v1639
        %1641 = vmatprep.subr.mxu0 0.0
        %v1642 = vand.u32 %v1348, 4294901760
        %v1643 = vsub.f32 %v1348, %v1642
        %1644 = vmatpush1.msra.mxu0 %v1643
        %1645 = vmatprep.subr.mxu0 0.0
        %v1646 = vand.u32 %v1349, 4294901760
        %v1647 = vsub.f32 %v1349, %v1646
        %1648 = vmatpush1.msra.mxu0 %v1647
        %1649 = vmatprep.subr.mxu0 0.0
        %v1650 = vand.u32 %v1350, 4294901760
        %v1651 = vsub.f32 %v1350, %v1650
        %1652 = vmatpush1.msra.mxu0 %v1651
        %1653 = vmatprep.subr.mxu0 0.0
        %v1654 = vand.u32 %v1351, 4294901760
        %v1655 = vsub.f32 %v1351, %v1654
        %1656 = vmatpush1.msra.mxu0 %v1655
        %1657 = vmatprep.subr.mxu0 0.0
        %v1658 = vand.u32 %v1352, 4294901760
        %v1659 = vsub.f32 %v1352, %v1658
        %1660 = vmatpush1.msra.mxu0 %v1659
        %1661 = vmatprep.subr.mxu0 0.0
        %v1662 = vand.u32 %v1353, 4294901760
        %v1663 = vsub.f32 %v1353, %v1662
        %1664 = vmatpush1.msra.mxu0 %v1663
        %1665 = vmatprep.subr.mxu0 0.0
        %v1666 = vand.u32 %v1354, 4294901760
        %v1667 = vsub.f32 %v1354, %v1666
        %1668 = vmatpush1.msra.mxu0 %v1667
        %1669 = vmatprep.subr.mxu0 0.0
        %1670 = vmatpush1.msra.mxu0 0.0
        %1671 = vmatprep.subr.mxu0 0.0
        %1672 = vmatpush1.msra.mxu0 0.0
        %1673 = vmatprep.subr.mxu0 0.0
        %1674 = vmatpush1.msra.mxu0 0.0
        %1675 = vmatprep.subr.mxu0 0.0
        %1676 = vmatpush1.msra.mxu0 0.0
        %1677 = vmatprep.subr.mxu0 0.0
        %1678 = vmatpush1.msra.mxu0 0.0
        %1679 = vmatprep.subr.mxu0 0.0
        %1680 = vmatpush1.msra.mxu0 0.0
        %1681 = vmatprep.subr.mxu0 0.0
        %1682 = vmatpush1.msra.mxu0 0.0
        %1683 = vmatprep.subr.mxu0 0.0
        %1684 = vmatpush1.msra.mxu0 0.0
        %1685 = vmatprep.subr.mxu0 0.0
        %1686 = vmatpush1.msra.mxu0 0.0
        %1687 = vmatprep.subr.mxu0 0.0
        %1688 = vmatpush1.msra.mxu0 0.0
        %1689 = vmatprep.subr.mxu0 0.0
        %1690 = vmatpush1.msra.mxu0 0.0
        %1691 = vmatprep.subr.mxu0 0.0
        %1692 = vmatpush1.msra.mxu0 0.0
        %1693 = vmatprep.subr.mxu0 0.0
        %1694 = vmatpush1.msra.mxu0 0.0
        %1695 = vmatprep.subr.mxu0 0.0
        %1696 = vmatpush1.msra.mxu0 0.0
        %1697 = vmatprep.subr.mxu0 0.0
        %1698 = vmatpush1.msra.mxu0 0.0
        %1699 = vmatprep.subr.mxu0 0.0
        %1700 = vmatpush1.msra.mxu0 0.0
        %1701 = vmatprep.mubr.f32.mxu0 0.0
        %v1702 = vand.u32 %v1337, 4294901760
        %v1703 = vsub.f32 %v1337, %v1702
        %1704 = vmatmul.mubr.f32.gmra.mrb[0].mxu0 %v1703
        %v1705 = vpop.f32.mrb[0].mxu0
        %v1706 = vadd.f32 %v1602, %v1705
        %v1707 = vpop.f32.mrb[0].mxu0
        %1708 = vdwg.mxu0
        %1709 = vmatprep.subr.mxu0 0.0
        %v1710 = vand.u32 %v1339, 4294901760
        %1711 = vmatpush1.msra.mxu0 %v1710
        %1712 = vmatprep.subr.mxu0 0.0
        %v1713 = vand.u32 %v1340, 4294901760
        %1714 = vmatpush1.msra.mxu0 %v1713
        %1715 = vmatprep.subr.mxu0 0.0
        %v1716 = vand.u32 %v1341, 4294901760
        %1717 = vmatpush1.msra.mxu0 %v1716
        %1718 = vmatprep.subr.mxu0 0.0
        %v1719 = vand.u32 %v1342, 4294901760
        %1720 = vmatpush1.msra.mxu0 %v1719
        %1721 = vmatprep.subr.mxu0 0.0
        %v1722 = vand.u32 %v1343, 4294901760
        %1723 = vmatpush1.msra.mxu0 %v1722
        %1724 = vmatprep.subr.mxu0 0.0
        %v1725 = vand.u32 %v1344, 4294901760
        %1726 = vmatpush1.msra.mxu0 %v1725
        %1727 = vmatprep.subr.mxu0 0.0
        %v1728 = vand.u32 %v1345, 4294901760
        %1729 = vmatpush1.msra.mxu0 %v1728
        %1730 = vmatprep.subr.mxu0 0.0
        %v1731 = vand.u32 %v1346, 4294901760
        %1732 = vmatpush1.msra.mxu0 %v1731
        %1733 = vmatprep.subr.mxu0 0.0
        %v1734 = vand.u32 %v1347, 4294901760
        %1735 = vmatpush1.msra.mxu0 %v1734
        %1736 = vmatprep.subr.mxu0 0.0
        %v1737 = vand.u32 %v1348, 4294901760
        %1738 = vmatpush1.msra.mxu0 %v1737
        %1739 = vmatprep.subr.mxu0 0.0
        %v1740 = vand.u32 %v1349, 4294901760
        %1741 = vmatpush1.msra.mxu0 %v1740
        %1742 = vmatprep.subr.mxu0 0.0
        %v1743 = vand.u32 %v1350, 4294901760
        %1744 = vmatpush1.msra.mxu0 %v1743
        %1745 = vmatprep.subr.mxu0 0.0
        %v1746 = vand.u32 %v1351, 4294901760
        %1747 = vmatpush1.msra.mxu0 %v1746
        %1748 = vmatprep.subr.mxu0 0.0
        %v1749 = vand.u32 %v1352, 4294901760
        %1750 = vmatpush1.msra.mxu0 %v1749
        %1751 = vmatprep.subr.mxu0 0.0
        %v1752 = vand.u32 %v1353, 4294901760
        %1753 = vmatpush1.msra.mxu0 %v1752
        %1754 = vmatprep.subr.mxu0 0.0
        %v1755 = vand.u32 %v1354, 4294901760
        %1756 = vmatpush1.msra.mxu0 %v1755
        %1757 = vmatprep.subr.mxu0 0.0
        %1758 = vmatpush1.msra.mxu0 0.0
        %1759 = vmatprep.subr.mxu0 0.0
        %1760 = vmatpush1.msra.mxu0 0.0
        %1761 = vmatprep.subr.mxu0 0.0
        %1762 = vmatpush1.msra.mxu0 0.0
        %1763 = vmatprep.subr.mxu0 0.0
        %1764 = vmatpush1.msra.mxu0 0.0
        %1765 = vmatprep.subr.mxu0 0.0
        %1766 = vmatpush1.msra.mxu0 0.0
        %1767 = vmatprep.subr.mxu0 0.0
        %1768 = vmatpush1.msra.mxu0 0.0
        %1769 = vmatprep.subr.mxu0 0.0
        %1770 = vmatpush1.msra.mxu0 0.0
        %1771 = vmatprep.subr.mxu0 0.0
        %1772 = vmatpush1.msra.mxu0 0.0
        %1773 = vmatprep.subr.mxu0 0.0
        %1774 = vmatpush1.msra.mxu0 0.0
        %1775 = vmatprep.subr.mxu0 0.0
        %1776 = vmatpush1.msra.mxu0 0.0
        %1777 = vmatprep.subr.mxu0 0.0
        %1778 = vmatpush1.msra.mxu0 0.0
        %1779 = vmatprep.subr.mxu0 0.0
        %1780 = vmatpush1.msra.mxu0 0.0
        %1781 = vmatprep.subr.mxu0 0.0
        %1782 = vmatpush1.msra.mxu0 0.0
        %1783 = vmatprep.subr.mxu0 0.0
        %1784 = vmatpush1.msra.mxu0 0.0
        %1785 = vmatprep.subr.mxu0 0.0
        %1786 = vmatpush1.msra.mxu0 0.0
        %1787 = vmatprep.subr.mxu0 0.0
        %1788 = vmatpush1.msra.mxu0 0.0
        %1789 = vmatprep.mubr.f32.mxu0 0.0
        %v1790 = vand.u32 %v1337, 4294901760
        %v1791 = vsub.f32 %v1337, %v1790
        %v1792 = vand.u32 %v1791, 4294901760
        %1793 = vmatmul.mubr.f32.gmra.mrb[0].mxu0 %v1792
        %v1794 = vpop.f32.mrb[0].mxu0
        %v1795 = vadd.f32 %v1706, %v1794
        %v1796 = vpop.f32.mrb[0].mxu0
        %1797 = vdwg.mxu0
        %1798 = vmatprep.subr.mxu0 0.0
        %v1799 = vand.u32 %v1339, 4294901760
        %v1800 = vsub.f32 %v1339, %v1799
        %v1801 = vand.u32 %v1800, 4294901760
        %1802 = vmatpush1.msra.mxu0 %v1801
        %1803 = vmatprep.subr.mxu0 0.0
        %v1804 = vand.u32 %v1340, 4294901760
        %v1805 = vsub.f32 %v1340, %v1804
        %v1806 = vand.u32 %v1805, 4294901760
        %1807 = vmatpush1.msra.mxu0 %v1806
        %1808 = vmatprep.subr.mxu0 0.0
        %v1809 = vand.u32 %v1341, 4294901760
        %v1810 = vsub.f32 %v1341, %v1809
        %v1811 = vand.u32 %v1810, 4294901760
        %1812 = vmatpush1.msra.mxu0 %v1811
        %1813 = vmatprep.subr.mxu0 0.0
        %v1814 = vand.u32 %v1342, 4294901760
        %v1815 = vsub.f32 %v1342, %v1814
        %v1816 = vand.u32 %v1815, 4294901760
        %1817 = vmatpush1.msra.mxu0 %v1816
        %1818 = vmatprep.subr.mxu0 0.0
        %v1819 = vand.u32 %v1343, 4294901760
        %v1820 = vsub.f32 %v1343, %v1819
        %v1821 = vand.u32 %v1820, 4294901760
        %1822 = vmatpush1.msra.mxu0 %v1821
        %1823 = vmatprep.subr.mxu0 0.0
        %v1824 = vand.u32 %v1344, 4294901760
        %v1825 = vsub.f32 %v1344, %v1824
        %v1826 = vand.u32 %v1825, 4294901760
        %1827 = vmatpush1.msra.mxu0 %v1826
        %1828 = vmatprep.subr.mxu0 0.0
        %v1829 = vand.u32 %v1345, 4294901760
        %v1830 = vsub.f32 %v1345, %v1829
        %v1831 = vand.u32 %v1830, 4294901760
        %1832 = vmatpush1.msra.mxu0 %v1831
        %1833 = vmatprep.subr.mxu0 0.0
        %v1834 = vand.u32 %v1346, 4294901760
        %v1835 = vsub.f32 %v1346, %v1834
        %v1836 = vand.u32 %v1835, 4294901760
        %1837 = vmatpush1.msra.mxu0 %v1836
        %1838 = vmatprep.subr.mxu0 0.0
        %v1839 = vand.u32 %v1347, 4294901760
        %v1840 = vsub.f32 %v1347, %v1839
        %v1841 = vand.u32 %v1840, 4294901760
        %1842 = vmatpush1.msra.mxu0 %v1841
        %1843 = vmatprep.subr.mxu0 0.0
        %v1844 = vand.u32 %v1348, 4294901760
        %v1845 = vsub.f32 %v1348, %v1844
        %v1846 = vand.u32 %v1845, 4294901760
        %1847 = vmatpush1.msra.mxu0 %v1846
        %1848 = vmatprep.subr.mxu0 0.0
        %v1849 = vand.u32 %v1349, 4294901760
        %v1850 = vsub.f32 %v1349, %v1849
        %v1851 = vand.u32 %v1850, 4294901760
        %1852 = vmatpush1.msra.mxu0 %v1851
        %1853 = vmatprep.subr.mxu0 0.0
        %v1854 = vand.u32 %v1350, 4294901760
        %v1855 = vsub.f32 %v1350, %v1854
        %v1856 = vand.u32 %v1855, 4294901760
        %1857 = vmatpush1.msra.mxu0 %v1856
        %1858 = vmatprep.subr.mxu0 0.0
        %v1859 = vand.u32 %v1351, 4294901760
        %v1860 = vsub.f32 %v1351, %v1859
        %v1861 = vand.u32 %v1860, 4294901760
        %1862 = vmatpush1.msra.mxu0 %v1861
        %1863 = vmatprep.subr.mxu0 0.0
        %v1864 = vand.u32 %v1352, 4294901760
        %v1865 = vsub.f32 %v1352, %v1864
        %v1866 = vand.u32 %v1865, 4294901760
        %1867 = vmatpush1.msra.mxu0 %v1866
        %1868 = vmatprep.subr.mxu0 0.0
        %v1869 = vand.u32 %v1353, 4294901760
        %v1870 = vsub.f32 %v1353, %v1869
        %v1871 = vand.u32 %v1870, 4294901760
        %1872 = vmatpush1.msra.mxu0 %v1871
        %1873 = vmatprep.subr.mxu0 0.0
        %v1874 = vand.u32 %v1354, 4294901760
        %v1875 = vsub.f32 %v1354, %v1874
        %v1876 = vand.u32 %v1875, 4294901760
        %1877 = vmatpush1.msra.mxu0 %v1876
        %1878 = vmatprep.subr.mxu0 0.0
        %1879 = vmatpush1.msra.mxu0 0.0
        %1880 = vmatprep.subr.mxu0 0.0
        %1881 = vmatpush1.msra.mxu0 0.0
        %1882 = vmatprep.subr.mxu0 0.0
        %1883 = vmatpush1.msra.mxu0 0.0
        %1884 = vmatprep.subr.mxu0 0.0
        %1885 = vmatpush1.msra.mxu0 0.0
        %1886 = vmatprep.subr.mxu0 0.0
        %1887 = vmatpush1.msra.mxu0 0.0
        %1888 = vmatprep.subr.mxu0 0.0
        %1889 = vmatpush1.msra.mxu0 0.0
        %1890 = vmatprep.subr.mxu0 0.0
        %1891 = vmatpush1.msra.mxu0 0.0
        %1892 = vmatprep.subr.mxu0 0.0
        %1893 = vmatpush1.msra.mxu0 0.0
        %1894 = vmatprep.subr.mxu0 0.0
        %1895 = vmatpush1.msra.mxu0 0.0
        %1896 = vmatprep.subr.mxu0 0.0
        %1897 = vmatpush1.msra.mxu0 0.0
        %1898 = vmatprep.subr.mxu0 0.0
        %1899 = vmatpush1.msra.mxu0 0.0
        %1900 = vmatprep.subr.mxu0 0.0
        %1901 = vmatpush1.msra.mxu0 0.0
        %1902 = vmatprep.subr.mxu0 0.0
        %1903 = vmatpush1.msra.mxu0 0.0
        %1904 = vmatprep.subr.mxu0 0.0
        %1905 = vmatpush1.msra.mxu0 0.0
        %1906 = vmatprep.subr.mxu0 0.0
        %1907 = vmatpush1.msra.mxu0 0.0
        %1908 = vmatprep.subr.mxu0 0.0
        %1909 = vmatpush1.msra.mxu0 0.0
        %1910 = vmatprep.mubr.f32.mxu0 0.0
        %v1911 = vand.u32 %v1337, 4294901760
        %1912 = vmatmul.mubr.f32.gmra.mrb[0].mxu0 %v1911
        %v1913 = vpop.f32.mrb[0].mxu0
        %v1914 = vadd.f32 %v1795, %v1913
        %v1915 = vpop.f32.mrb[0].mxu0
        %1916 = vdwg.mxu0
        %1917 = vmatprep.subr.mxu0 0.0
        %v1918 = vand.u32 %v1339, 4294901760
        %1919 = vmatpush1.msra.mxu0 %v1918
        %1920 = vmatprep.subr.mxu0 0.0
        %v1921 = vand.u32 %v1340, 4294901760
        %1922 = vmatpush1.msra.mxu0 %v1921
        %1923 = vmatprep.subr.mxu0 0.0
        %v1924 = vand.u32 %v1341, 4294901760
        %1925 = vmatpush1.msra.mxu0 %v1924
        %1926 = vmatprep.subr.mxu0 0.0
        %v1927 = vand.u32 %v1342, 4294901760
        %1928 = vmatpush1.msra.mxu0 %v1927
        %1929 = vmatprep.subr.mxu0 0.0
        %v1930 = vand.u32 %v1343, 4294901760
        %1931 = vmatpush1.msra.mxu0 %v1930
        %1932 = vmatprep.subr.mxu0 0.0
        %v1933 = vand.u32 %v1344, 4294901760
        %1934 = vmatpush1.msra.mxu0 %v1933
        %1935 = vmatprep.subr.mxu0 0.0
        %v1936 = vand.u32 %v1345, 4294901760
        %1937 = vmatpush1.msra.mxu0 %v1936
        %1938 = vmatprep.subr.mxu0 0.0
        %v1939 = vand.u32 %v1346, 4294901760
        %1940 = vmatpush1.msra.mxu0 %v1939
        %1941 = vmatprep.subr.mxu0 0.0
        %v1942 = vand.u32 %v1347, 4294901760
        %1943 = vmatpush1.msra.mxu0 %v1942
        %1944 = vmatprep.subr.mxu0 0.0
        %v1945 = vand.u32 %v1348, 4294901760
        %1946 = vmatpush1.msra.mxu0 %v1945
        %1947 = vmatprep.subr.mxu0 0.0
        %v1948 = vand.u32 %v1349, 4294901760
        %1949 = vmatpush1.msra.mxu0 %v1948
        %1950 = vmatprep.subr.mxu0 0.0
        %v1951 = vand.u32 %v1350, 4294901760
        %1952 = vmatpush1.msra.mxu0 %v1951
        %1953 = vmatprep.subr.mxu0 0.0
        %v1954 = vand.u32 %v1351, 4294901760
        %1955 = vmatpush1.msra.mxu0 %v1954
        %1956 = vmatprep.subr.mxu0 0.0
        %v1957 = vand.u32 %v1352, 4294901760
        %1958 = vmatpush1.msra.mxu0 %v1957
        %1959 = vmatprep.subr.mxu0 0.0
        %v1960 = vand.u32 %v1353, 4294901760
        %1961 = vmatpush1.msra.mxu0 %v1960
        %1962 = vmatprep.subr.mxu0 0.0
        %v1963 = vand.u32 %v1354, 4294901760
        %1964 = vmatpush1.msra.mxu0 %v1963
        %1965 = vmatprep.subr.mxu0 0.0
        %1966 = vmatpush1.msra.mxu0 0.0
        %1967 = vmatprep.subr.mxu0 0.0
        %1968 = vmatpush1.msra.mxu0 0.0
        %1969 = vmatprep.subr.mxu0 0.0
        %1970 = vmatpush1.msra.mxu0 0.0
        %1971 = vmatprep.subr.mxu0 0.0
        %1972 = vmatpush1.msra.mxu0 0.0
        %1973 = vmatprep.subr.mxu0 0.0
        %1974 = vmatpush1.msra.mxu0 0.0
        %1975 = vmatprep.subr.mxu0 0.0
        %1976 = vmatpush1.msra.mxu0 0.0
        %1977 = vmatprep.subr.mxu0 0.0
        %1978 = vmatpush1.msra.mxu0 0.0
        %1979 = vmatprep.subr.mxu0 0.0
        %1980 = vmatpush1.msra.mxu0 0.0
        %1981 = vmatprep.subr.mxu0 0.0
        %1982 = vmatpush1.msra.mxu0 0.0
        %1983 = vmatprep.subr.mxu0 0.0
        %1984 = vmatpush1.msra.mxu0 0.0
        %1985 = vmatprep.subr.mxu0 0.0
        %1986 = vmatpush1.msra.mxu0 0.0
        %1987 = vmatprep.subr.mxu0 0.0
        %1988 = vmatpush1.msra.mxu0 0.0
        %1989 = vmatprep.subr.mxu0 0.0
        %1990 = vmatpush1.msra.mxu0 0.0
        %1991 = vmatprep.subr.mxu0 0.0
        %1992 = vmatpush1.msra.mxu0 0.0
        %1993 = vmatprep.subr.mxu0 0.0
        %1994 = vmatpush1.msra.mxu0 0.0
        %1995 = vmatprep.subr.mxu0 0.0
        %1996 = vmatpush1.msra.mxu0 0.0
        %1997 = vmatprep.mubr.f32.mxu0 0.0
        %v1998 = vand.u32 %v1337, 4294901760
        %1999 = vmatmul.mubr.f32.gmra.mrb[0].mxu0 %v1998
        %v2000 = vpop.f32.mrb[0].mxu0
        %v2001 = vadd.f32 %v1914, %v2000
        %v2002 = vpop.f32.mrb[0].mxu0
        %2003 = vdwg.mxu0
        %vm2004 = vcmask 64512
        %2005 = vst.msk [vmem:[%s207] sm:$0xff] %vm2004, %v2001
        %p2006 = scmp.lt.s32.totalorder %s16, 1
        %s2007 = scalar_select %p2006, %s16, 1
        %s2008 = smul.addr %s2007, 8
        %s2009 = scalar_lea.vmem %s4, %s2008
        // Predicated region
        $region41: #{tpu_custom_call.1} parent=35 // pred_check
          %p2010 = pneg %p123
        $region42: #{tpu_custom_call.1} parent=35 // pred_check_branch
          %2012 = sbr.rel (%p2010) target = $region44
        $region43: #{tpu_custom_call.1} parent=35 // pred_region
          _
        $region44: #{tpu_custom_call.1} parent=35 // pred_fallthru
          _
      $region36: #{tpu_custom_call.1} parent=5 // pred_fallthru
        _
      %p2013 = scmp.le.s32.totalorder 2, %s11
      // Predicated region
      $region45: #{tpu_custom_call.1} parent=5 // pred_check
        %p2014 = pneg %p2013
      $region46: #{tpu_custom_call.1} parent=5 // pred_check_branch
        %2016 = sbr.rel (%p2014) target = $region48
      $region47: #{tpu_custom_call.1} parent=5 // pred_region
        %s2017 = ssub.s32 %s11, 2
        // Predicated region
        $region49: #{tpu_custom_call.1} parent=47 // pred_check
          %p2018 = pneg %p129
        $region50: #{tpu_custom_call.1} parent=47 // pred_check_branch
          %2020 = sbr.rel (%p2018) target = $region52
        $region51: #{tpu_custom_call.1} parent=47 // pred_region
          %p2021 = scmp.lt.s32.totalorder %s17, 1
          %s2022 = scalar_select %p2021, %s17, 1
          %s2023 = smul.addr %s2022, 8
          %s2024 = scalar_lea.vmem %s4, %s2023
        $region52: #{tpu_custom_call.1} parent=47 // pred_fallthru
          _
      $region48: #{tpu_custom_call.1} parent=5 // pred_fallthru
        _
    $region6: #{tpu_custom_call.1} parent=1 // loop_footer
      %s15 = sadd.s32 1, %s11
    $region7: #{tpu_custom_call.1} parent=1 // loop_footer_branch
      %10 = sbr.rel target = $region3
    $region8: #{tpu_custom_call.1} parent=1 // loop_exit
      _
    %2025 = vsyncpa [#allocation3], 1
    %s2026 = scalar_lea.sflag [#allocation3], 1
    %2027 = vsyncpa %s2026, 1

</llo_original>
